<compile_context>
chip_gen: v5e
topology: v5e:2x2
jax: 0.10.0
libtpu: 0.0.40
codegen_flags: <defaults>
</compile_context>

<pallas_src>
import functools

import jax
import jax.numpy as jnp
from jax.experimental import pallas as pl
from jax.experimental.pallas import tpu as pltpu

KERNEL_SIZE = 7
PAD = 3 if KERNEL_SIZE == 7 else 1


def _round_up(x, m):
    return ((x + m - 1) // m) * m


def _tpu_generation():
    """Best-effort TPU generation (5, 6, 7, ...) from device_kind; default 6."""
    try:
        kind = jax.devices()[0].device_kind.lower()
    except Exception:
        return 6
    for g in (7, 6, 5, 4, 3, 2):
        if (f"v{g}" in kind) or (f"tpu{g}" in kind):
            return g
    return 6


def _choose_channel_tile(C, HW, itemsize, budget):
    """Largest channel tile that divides C, is layout-legal as the second-minor
    block dim (multiple of 8, or the full C), and fits the VMEM budget.  If no
    legal tile fits the budget, fall back to the SMALLEST legal tile (the
    caller raises vmem_limit_bytes accordingly)."""
    legal = [d for d in range(1, C + 1)
             if C % d == 0 and (d % 8 == 0 or d == C)]
    fitting = [d for d in legal if d * HW * itemsize <= budget]
    if fitting:
        return max(fitting)
    return min(legal)


def _choose_batch_tile(N, TC, HW, itemsize, budget, num_tc):
    """Pack several batch elements per grid step when the per-element footprint
    is small.  Only on multi-TensorCore chips (v7x) do we sacrifice block size
    to keep >= num_tc parallel steps on the batch axis."""
    cands = [d for d in range(1, N + 1)
             if N % d == 0 and d * TC * HW * itemsize <= budget]
    if not cands:
        return 1
    if num_tc > 1:
        pref = [d for d in cands if N // d >= num_tc]
        if pref:
            return max(pref)
    return max(cands)


def _fused_kernel(w_ref, x_ref, o_ref, acc_ref, *, H, W, OFF, NB):
    """Fused channel reduction + 7x7 conv + sigmoid.

    w_ref:   (2*K*K,) f32 in SMEM; avg-channel taps pre-scaled by 1/C.
    x_ref:   (NB, TC, HW) input block (lane-dense over HW).
    o_ref:   (NB, 1, HW) output block (lane-dense), written at the last c step.
    acc_ref: (2, NB, HWP) f32 VMEM scratch; zero-padded flat [sum, max] maps,
             real data occupies lanes [OFF, OFF + HW).
    """
    K = KERNEL_SIZE
    HW = H * W
    c = pl.program_id(1)
    last_c = pl.num_programs(1) - 1

    x = x_ref[...].astype(jnp.float32)            # (NB, TC, HW)
    part_sum = jnp.sum(x, axis=1)                 # (NB, HW)
    part_max = jnp.max(x, axis=1)                 # (NB, HW)

    @pl.when(c == 0)
    def _():
        acc_ref[...] = jnp.zeros_like(acc_ref)    # also clears the pad lanes
        acc_ref[0, :, pl.ds(OFF, HW)] = part_sum
        acc_ref[1, :, pl.ds(OFF, HW)] = part_max

    @pl.when(c > 0)
    def _():
        acc_ref[0, :, pl.ds(OFF, HW)] = acc_ref[0, :, pl.ds(OFF, HW)] + part_sum
        acc_ref[1, :, pl.ds(OFF, HW)] = jnp.maximum(
            acc_ref[1, :, pl.ds(OFF, HW)], part_max)

    @pl.when(c == last_c)
    def _():
        # 7x7 "same" conv on the resident padded maps + sigmoid, all in VMEM.
        col = jax.lax.broadcasted_iota(jnp.int32, (NB, HW), 1) % W
        conv = jnp.zeros((NB, HW), jnp.float32)
        for kx in range(K):                       # group taps by dx -> 7 masks
            dx = kx - PAD
            t = jnp.zeros((NB, HW), jnp.float32)
            for ch in range(2):                   # 0 = sum (avg), 1 = max
                for ky in range(K):
                    dy = ky - PAD
                    off = OFF + dy * W + dx       # static lane-window offset
                    w = w_ref[ch * K * K + ky * K + kx]
                    t = t + w * acc_ref[ch, :, pl.ds(off, HW)]
            if dx < 0:                            # zero out row-wrapped columns
                t = jnp.where(col >= -dx, t, 0.0)
            elif dx > 0:
                t = jnp.where(col < W - dx, t, 0.0)
            conv = conv + t
        o_ref[:, 0, :] = jax.nn.sigmoid(conv).astype(o_ref.dtype)


def spatial_attention(x, conv_weight):
    """x: (N, C, H, W); conv_weight: (1, 2, K, K).  Returns (N, 1, H, W)."""
    N, C, H, W = x.shape
    HW = H * W
    K = KERNEL_SIZE
    itemsize = x.dtype.itemsize

    gen = _tpu_generation()
    num_tc = 2 if gen >= 7 else 1
    if gen >= 7:
        target_block_bytes = 8 << 20      # v7x: 3.2 TB/s HBM -> bigger blocks
    elif gen == 6:
        target_block_bytes = 4 << 20      # v6e: measured 85% -> 86% roofline
    else:
        target_block_bytes = 2 << 20      # v5e: per-step overhead already tiny

    TC = _choose_channel_tile(C, HW, itemsize, target_block_bytes)
    NB = _choose_batch_tile(N, TC, HW, itemsize, target_block_bytes, num_tc)
    # Note: if N // NB < 2 on v7x (e.g. N == 1) the second TensorCore idles;
    # splitting HW would require conv halos with this fused design, so accept it.

    # Zero-padded flat layout: OFF >= 3*W + 3 pad lanes each side, rounded up
    # to a lane multiple so the per-step accumulator updates stay aligned.
    OFF = _round_up(PAD * W + PAD, 128)
    HWP = 2 * OFF + HW

    x_flat = x.reshape(N, C, HW)                       # NCHW is contiguous
    # Fold the mean's 1/C into the avg-channel taps; flatten for SMEM.
    w = conv_weight.astype(jnp.float32)[0]             # (2, K, K)
    w_flat = jnp.concatenate([(w[0] / float(C)).reshape(-1),
                              w[1].reshape(-1)])       # (2*K*K,)

    in_block_bytes = NB * TC * HW * itemsize
    out_block_bytes = NB * HW * 4
    scratch_bytes = 2 * NB * HWP * 4
    need = 2 * in_block_bytes + 2 * out_block_bytes + scratch_bytes + (1 << 20)
    vmem_limit = None
    if need > (12 << 20):                              # default scoped VMEM is
        vmem_limit = int(min(max(need + (8 << 20),     # 16 MiB (v5e) / 32 MiB
                                 32 << 20), 40 << 20)) # (v6e, v7x)

    out_flat = pl.pallas_call(
        functools.partial(_fused_kernel, H=H, W=W, OFF=OFF, NB=NB),
        out_shape=jax.ShapeDtypeStruct((N, 1, HW), jnp.float32),
        grid_spec=pltpu.PrefetchScalarGridSpec(
            num_scalar_prefetch=0,
            grid=(N // NB, C // TC),                   # reduction axis (C) last
            in_specs=[
                pl.BlockSpec(memory_space=pltpu.MemorySpace.SMEM),   # weights
                pl.BlockSpec((NB, TC, HW), lambda n, c: (n, c, 0)),  # x
            ],
            out_specs=pl.BlockSpec((NB, 1, HW), lambda n, c: (n, 0, 0)),
            scratch_shapes=[pltpu.VMEM((2, NB, HWP), jnp.float32)],
        ),
        compiler_params=pltpu.CompilerParams(
            dimension_semantics=("parallel", "arbitrary"),
            vmem_limit_bytes=vmem_limit),
    )(w_flat, x_flat)

    return out_flat.reshape(N, 1, H, W).astype(x.dtype)


def _reference(x, conv_weight):
    """Plain-JAX reference matching the PyTorch forward."""
    avg = jnp.mean(x, axis=1, keepdims=True)
    mx = jnp.max(x, axis=1, keepdims=True)
    cat = jnp.concatenate([avg, mx], axis=1)            # (N, 2, H, W)
    out = jax.lax.conv_general_dilated(
        cat, conv_weight,
        window_strides=(1, 1),
        padding=[(PAD, PAD), (PAD, PAD)],
        dimension_numbers=("NCHW", "OIHW", "NCHW"),
    )
    return jax.nn.sigmoid(out)


if __name__ == "__main__":
    key = jax.random.PRNGKey(0)
    k_x, k_w = jax.random.split(key)

    N, C, H, W = 2, 4, 16, 16
    x = jax.random.normal(k_x, (N, C, H, W), dtype=jnp.float32)

    # Deterministic synthetic conv weight, shape (out=1, in=2, K, K),
    # scaled like PyTorch's default uniform bound 1/sqrt(2*K*K).
    bound = 1.0 / jnp.sqrt(2.0 * KERNEL_SIZE * KERNEL_SIZE)
    conv_weight = jax.random.uniform(
        k_w, (1, 2, KERNEL_SIZE, KERNEL_SIZE),
        minval=-bound, maxval=bound, dtype=jnp.float32)

    out = jax.block_until_ready(spatial_attention(x, conv_weight))
    ref = jax.block_until_ready(_reference(x, conv_weight))

    assert out.shape == (N, 1, H, W)
    err = float(jnp.max(jnp.abs(out - ref)))
    assert jnp.allclose(out, ref, atol=1e-5, rtol=1e-5), err

    print("KERNEL_OK")
</pallas_src>

<mosaic_0001>
module attributes {stable_mosaic.version = 11 : i64} {
  func.func @_fused_kernel(%arg0: i32, %arg1: i32, %arg2: memref<98xf32, #tpu.memory_space<smem>>, %arg3: memref<2x4x256xf32, #tpu.memory_space<vmem>>, %arg4: memref<2x1x256xf32, #tpu.memory_space<vmem>>, %arg5: memref<2x2x512xf32, #tpu.memory_space<vmem>>) attributes {dimension_semantics = [#tpu.dimension_semantics<parallel>, #tpu.dimension_semantics<arbitrary>], iteration_bounds = array<i64: 1, 1>, scalar_prefetch = 0 : i64, scratch_operands = 1 : i64, tpu.core_type = #tpu.core_type<tc>, window_params = [{transform_indices = @transform_0, window_bounds = array<i64: 98>}, {transform_indices = @transform_1, window_bounds = array<i64: 2, 4, 256>}, {transform_indices = @transform_2, window_bounds = array<i64: 2, 1, 256>}]} {
    %c0 = arith.constant 0 : index
    %c0_0 = arith.constant 0 : index
    %c0_1 = arith.constant 0 : index
    %0 = vector.load %arg3[%c0, %c0_0, %c0_1] : memref<2x4x256xf32, #tpu.memory_space<vmem>>, vector<2x4x256xf32>
    %cst = arith.constant dense<0.000000e+00> : vector<2x256xf32>
    %1 = vector.multi_reduction <add>, %0, %cst [1] : vector<2x4x256xf32> to vector<2x256xf32>
    %cst_2 = arith.constant dense<0xFF800000> : vector<2x256xf32>
    %2 = vector.multi_reduction <maximumf>, %0, %cst_2 [1] : vector<2x4x256xf32> to vector<2x256xf32>
    %c0_i32 = arith.constant 0 : i32
    %3 = arith.cmpi eq, %arg1, %c0_i32 : i32
    %4 = arith.extui %3 : i1 to i32
    %c0_i32_3 = arith.constant 0 : i32
    %5 = arith.cmpi ne, %4, %c0_i32_3 : i32
    scf.if %5 {
      %cst_8 = arith.constant 0.000000e+00 : f32
      %12 = vector.broadcast %cst_8 : f32 to vector<2x2x512xf32>
      %c0_9 = arith.constant 0 : index
      %c0_10 = arith.constant 0 : index
      %c0_11 = arith.constant 0 : index
      %13 = vector.load %arg5[%c0_9, %c0_10, %c0_11] : memref<2x2x512xf32, #tpu.memory_space<vmem>>, vector<2x2x512xf32>
      tpu.vector_store %arg5[%c0_9, %c0_10, %c0_11], %12 {strides = array<i32>} : memref<2x2x512xf32, #tpu.memory_space<vmem>>, vector<2x2x512xf32>,
      %c0_12 = arith.constant 0 : index
      %c0_13 = arith.constant 0 : index
      %c128 = arith.constant 128 : index
      %14 = vector.load %arg5[%c0_12, %c0_13, %c128] : memref<2x2x512xf32, #tpu.memory_space<vmem>>, vector<1x2x256xf32>
      %15 = vector.shape_cast %14 : vector<1x2x256xf32> to vector<2x256xf32>
      %16 = vector.shape_cast %1 : vector<2x256xf32> to vector<1x2x256xf32>
      tpu.vector_store %arg5[%c0_12, %c0_13, %c128], %16 {strides = array<i32>} : memref<2x2x512xf32, #tpu.memory_space<vmem>>, vector<1x2x256xf32>,
      %c1 = arith.constant 1 : index
      %c0_14 = arith.constant 0 : index
      %c128_15 = arith.constant 128 : index
      %17 = vector.load %arg5[%c1, %c0_14, %c128_15] : memref<2x2x512xf32, #tpu.memory_space<vmem>>, vector<1x2x256xf32>
      %18 = vector.shape_cast %17 : vector<1x2x256xf32> to vector<2x256xf32>
      %19 = vector.shape_cast %2 : vector<2x256xf32> to vector<1x2x256xf32>
      tpu.vector_store %arg5[%c1, %c0_14, %c128_15], %19 {strides = array<i32>} : memref<2x2x512xf32, #tpu.memory_space<vmem>>, vector<1x2x256xf32>,
    } else {
    }
    %c0_i32_4 = arith.constant 0 : i32
    %6 = arith.cmpi sgt, %arg1, %c0_i32_4 : i32
    %7 = arith.extui %6 : i1 to i32
    %c0_i32_5 = arith.constant 0 : i32
    %8 = arith.cmpi ne, %7, %c0_i32_5 : i32
    scf.if %8 {
      %c0_8 = arith.constant 0 : index
      %c0_9 = arith.constant 0 : index
      %c128 = arith.constant 128 : index
      %12 = vector.load %arg5[%c0_8, %c0_9, %c128] : memref<2x2x512xf32, #tpu.memory_space<vmem>>, vector<1x2x256xf32>
      %13 = vector.shape_cast %12 : vector<1x2x256xf32> to vector<2x256xf32>
      %14 = arith.addf %13, %1 : vector<2x256xf32>
      %c0_10 = arith.constant 0 : index
      %c0_11 = arith.constant 0 : index
      %c128_12 = arith.constant 128 : index
      %15 = vector.load %arg5[%c0_10, %c0_11, %c128_12] : memref<2x2x512xf32, #tpu.memory_space<vmem>>, vector<1x2x256xf32>
      %16 = vector.shape_cast %15 : vector<1x2x256xf32> to vector<2x256xf32>
      %17 = vector.shape_cast %14 : vector<2x256xf32> to vector<1x2x256xf32>
      tpu.vector_store %arg5[%c0_10, %c0_11, %c128_12], %17 {strides = array<i32>} : memref<2x2x512xf32, #tpu.memory_space<vmem>>, vector<1x2x256xf32>,
      %c1 = arith.constant 1 : index
      %c0_13 = arith.constant 0 : index
      %c128_14 = arith.constant 128 : index
      %18 = vector.load %arg5[%c1, %c0_13, %c128_14] : memref<2x2x512xf32, #tpu.memory_space<vmem>>, vector<1x2x256xf32>
      %19 = vector.shape_cast %18 : vector<1x2x256xf32> to vector<2x256xf32>
      %20 = arith.maximumf %19, %2 : vector<2x256xf32>
      %c1_15 = arith.constant 1 : index
      %c0_16 = arith.constant 0 : index
      %c128_17 = arith.constant 128 : index
      %21 = vector.load %arg5[%c1_15, %c0_16, %c128_17] : memref<2x2x512xf32, #tpu.memory_space<vmem>>, vector<1x2x256xf32>
      %22 = vector.shape_cast %21 : vector<1x2x256xf32> to vector<2x256xf32>
      %23 = vector.shape_cast %20 : vector<2x256xf32> to vector<1x2x256xf32>
      tpu.vector_store %arg5[%c1_15, %c0_16, %c128_17], %23 {strides = array<i32>} : memref<2x2x512xf32, #tpu.memory_space<vmem>>, vector<1x2x256xf32>,
    } else {
    }
    %c0_i32_6 = arith.constant 0 : i32
    %9 = arith.cmpi eq, %arg1, %c0_i32_6 : i32
    %10 = arith.extui %9 : i1 to i32
    %c0_i32_7 = arith.constant 0 : i32
    %11 = arith.cmpi ne, %10, %c0_i32_7 : i32
    scf.if %11 {
      %12 = tpu.iota {dimensions = array<i32: 1>} : vector<2x256xi32>
      %c16_i32 = arith.constant 16 : i32
      %c0_i32_8 = arith.constant 0 : i32
      %13 = arith.cmpi eq, %c16_i32, %c0_i32_8 : i32
      %c1_i32 = arith.constant 1 : i32
      %14 = arith.select %13, %c1_i32, %c16_i32 : i32
      %15 = vector.broadcast %14 : i32 to vector<2x256xi32>
      %16 = arith.remsi %12, %15 : vector<2x256xi32>
      %c0_i32_9 = arith.constant 0 : i32
      %17 = vector.broadcast %c0_i32_9 : i32 to vector<2x256xi32>
      %18 = arith.cmpi ne, %16, %17 : vector<2x256xi32>
      %c0_i32_10 = arith.constant 0 : i32
      %19 = vector.broadcast %c0_i32_10 : i32 to vector<2x256xi32>
      %20 = arith.cmpi slt, %16, %19 : vector<2x256xi32>
      %c0_i32_11 = arith.constant 0 : i32
      %21 = arith.cmpi slt, %14, %c0_i32_11 : i32
      %22 = vector.broadcast %21 : i1 to vector<2x256xi1>
      %23 = vector.broadcast %22 : vector<2x256xi1> to vector<2x256xi1>
      %24 = arith.xori %20, %23 : vector<2x256xi1>
      %25 = arith.andi %24, %18 : vector<2x256xi1>
      %26 = vector.broadcast %14 : i32 to vector<2x256xi32>
      %27 = arith.addi %16, %26 : vector<2x256xi32>
      %28 = arith.select %25, %27, %16 : vector<2x256xi1>, vector<2x256xi32>
      %cst_12 = arith.constant 0.000000e+00 : f32
      %29 = vector.broadcast %cst_12 : f32 to vector<2x256xf32>
      %cst_13 = arith.constant 0.000000e+00 : f32
      %30 = vector.broadcast %cst_13 : f32 to vector<2x256xf32>
      %c0_14 = arith.constant 0 : index
      %31 = memref.load %arg2[%c0_14] : memref<98xf32, #tpu.memory_space<smem>>
      %c0_15 = arith.constant 0 : index
      %c0_16 = arith.constant 0 : index
      %c77 = arith.constant 77 : index
      %32 = vector.load %arg5[%c0_15, %c0_16, %c77] : memref<2x2x512xf32, #tpu.memory_space<vmem>>, vector<1x2x256xf32>
      %33 = vector.shape_cast %32 : vector<1x2x256xf32> to vector<2x256xf32>
      %34 = vector.broadcast %31 : f32 to vector<2x256xf32>
      %35 = arith.mulf %34, %33 : vector<2x256xf32>
      %36 = arith.addf %30, %35 : vector<2x256xf32>
      %c7 = arith.constant 7 : index
      %37 = memref.load %arg2[%c7] : memref<98xf32, #tpu.memory_space<smem>>
      %c0_17 = arith.constant 0 : index
      %c0_18 = arith.constant 0 : index
      %c93 = arith.constant 93 : index
      %38 = vector.load %arg5[%c0_17, %c0_18, %c93] : memref<2x2x512xf32, #tpu.memory_space<vmem>>, vector<1x2x256xf32>
      %39 = vector.shape_cast %38 : vector<1x2x256xf32> to vector<2x256xf32>
      %40 = vector.broadcast %37 : f32 to vector<2x256xf32>
      %41 = arith.mulf %40, %39 : vector<2x256xf32>
      %42 = arith.addf %36, %41 : vector<2x256xf32>
      %c14 = arith.constant 14 : index
      %43 = memref.load %arg2[%c14] : memref<98xf32, #tpu.memory_space<smem>>
      %c0_19 = arith.constant 0 : index
      %c0_20 = arith.constant 0 : index
      %c109 = arith.constant 109 : index
      %44 = vector.load %arg5[%c0_19, %c0_20, %c109] : memref<2x2x512xf32, #tpu.memory_space<vmem>>, vector<1x2x256xf32>
      %45 = vector.shape_cast %44 : vector<1x2x256xf32> to vector<2x256xf32>
      %46 = vector.broadcast %43 : f32 to vector<2x256xf32>
      %47 = arith.mulf %46, %45 : vector<2x256xf32>
      %48 = arith.addf %42, %47 : vector<2x256xf32>
      %c21 = arith.constant 21 : index
      %49 = memref.load %arg2[%c21] : memref<98xf32, #tpu.memory_space<smem>>
      %c0_21 = arith.constant 0 : index
      %c0_22 = arith.constant 0 : index
      %c125 = arith.constant 125 : index
      %50 = vector.load %arg5[%c0_21, %c0_22, %c125] : memref<2x2x512xf32, #tpu.memory_space<vmem>>, vector<1x2x256xf32>
      %51 = vector.shape_cast %50 : vector<1x2x256xf32> to vector<2x256xf32>
      %52 = vector.broadcast %49 : f32 to vector<2x256xf32>
      %53 = arith.mulf %52, %51 : vector<2x256xf32>
      %54 = arith.addf %48, %53 : vector<2x256xf32>
      %c28 = arith.constant 28 : index
      %55 = memref.load %arg2[%c28] : memref<98xf32, #tpu.memory_space<smem>>
      %c0_23 = arith.constant 0 : index
      %c0_24 = arith.constant 0 : index
      %c141 = arith.constant 141 : index
      %56 = vector.load %arg5[%c0_23, %c0_24, %c141] : memref<2x2x512xf32, #tpu.memory_space<vmem>>, vector<1x2x256xf32>
      %57 = vector.shape_cast %56 : vector<1x2x256xf32> to vector<2x256xf32>
      %58 = vector.broadcast %55 : f32 to vector<2x256xf32>
      %59 = arith.mulf %58, %57 : vector<2x256xf32>
      %60 = arith.addf %54, %59 : vector<2x256xf32>
      %c35 = arith.constant 35 : index
      %61 = memref.load %arg2[%c35] : memref<98xf32, #tpu.memory_space<smem>>
      %c0_25 = arith.constant 0 : index
      %c0_26 = arith.constant 0 : index
      %c157 = arith.constant 157 : index
      %62 = vector.load %arg5[%c0_25, %c0_26, %c157] : memref<2x2x512xf32, #tpu.memory_space<vmem>>, vector<1x2x256xf32>
      %63 = vector.shape_cast %62 : vector<1x2x256xf32> to vector<2x256xf32>
      %64 = vector.broadcast %61 : f32 to vector<2x256xf32>
      %65 = arith.mulf %64, %63 : vector<2x256xf32>
      %66 = arith.addf %60, %65 : vector<2x256xf32>
      %c42 = arith.constant 42 : index
      %67 = memref.load %arg2[%c42] : memref<98xf32, #tpu.memory_space<smem>>
      %c0_27 = arith.constant 0 : index
      %c0_28 = arith.constant 0 : index
      %c173 = arith.constant 173 : index
      %68 = vector.load %arg5[%c0_27, %c0_28, %c173] : memref<2x2x512xf32, #tpu.memory_space<vmem>>, vector<1x2x256xf32>
      %69 = vector.shape_cast %68 : vector<1x2x256xf32> to vector<2x256xf32>
      %70 = vector.broadcast %67 : f32 to vector<2x256xf32>
      %71 = arith.mulf %70, %69 : vector<2x256xf32>
      %72 = arith.addf %66, %71 : vector<2x256xf32>
      %c49 = arith.constant 49 : index
      %73 = memref.load %arg2[%c49] : memref<98xf32, #tpu.memory_space<smem>>
      %c1 = arith.constant 1 : index
      %c0_29 = arith.constant 0 : index
      %c77_30 = arith.constant 77 : index
      %74 = vector.load %arg5[%c1, %c0_29, %c77_30] : memref<2x2x512xf32, #tpu.memory_space<vmem>>, vector<1x2x256xf32>
      %75 = vector.shape_cast %74 : vector<1x2x256xf32> to vector<2x256xf32>
      %76 = vector.broadcast %73 : f32 to vector<2x256xf32>
      %77 = arith.mulf %76, %75 : vector<2x256xf32>
      %78 = arith.addf %72, %77 : vector<2x256xf32>
      %c56 = arith.constant 56 : index
      %79 = memref.load %arg2[%c56] : memref<98xf32, #tpu.memory_space<smem>>
      %c1_31 = arith.constant 1 : index
      %c0_32 = arith.constant 0 : index
      %c93_33 = arith.constant 93 : index
      %80 = vector.load %arg5[%c1_31, %c0_32, %c93_33] : memref<2x2x512xf32, #tpu.memory_space<vmem>>, vector<1x2x256xf32>
      %81 = vector.shape_cast %80 : vector<1x2x256xf32> to vector<2x256xf32>
      %82 = vector.broadcast %79 : f32 to vector<2x256xf32>
      %83 = arith.mulf %82, %81 : vector<2x256xf32>
      %84 = arith.addf %78, %83 : vector<2x256xf32>
      %c63 = arith.constant 63 : index
      %85 = memref.load %arg2[%c63] : memref<98xf32, #tpu.memory_space<smem>>
      %c1_34 = arith.constant 1 : index
      %c0_35 = arith.constant 0 : index
      %c109_36 = arith.constant 109 : index
      %86 = vector.load %arg5[%c1_34, %c0_35, %c109_36] : memref<2x2x512xf32, #tpu.memory_space<vmem>>, vector<1x2x256xf32>
      %87 = vector.shape_cast %86 : vector<1x2x256xf32> to vector<2x256xf32>
      %88 = vector.broadcast %85 : f32 to vector<2x256xf32>
      %89 = arith.mulf %88, %87 : vector<2x256xf32>
      %90 = arith.addf %84, %89 : vector<2x256xf32>
      %c70 = arith.constant 70 : index
      %91 = memref.load %arg2[%c70] : memref<98xf32, #tpu.memory_space<smem>>
      %c1_37 = arith.constant 1 : index
      %c0_38 = arith.constant 0 : index
      %c125_39 = arith.constant 125 : index
      %92 = vector.load %arg5[%c1_37, %c0_38, %c125_39] : memref<2x2x512xf32, #tpu.memory_space<vmem>>, vector<1x2x256xf32>
      %93 = vector.shape_cast %92 : vector<1x2x256xf32> to vector<2x256xf32>
      %94 = vector.broadcast %91 : f32 to vector<2x256xf32>
      %95 = arith.mulf %94, %93 : vector<2x256xf32>
      %96 = arith.addf %90, %95 : vector<2x256xf32>
      %c77_40 = arith.constant 77 : index
      %97 = memref.load %arg2[%c77_40] : memref<98xf32, #tpu.memory_space<smem>>
      %c1_41 = arith.constant 1 : index
      %c0_42 = arith.constant 0 : index
      %c141_43 = arith.constant 141 : index
      %98 = vector.load %arg5[%c1_41, %c0_42, %c141_43] : memref<2x2x512xf32, #tpu.memory_space<vmem>>, vector<1x2x256xf32>
      %99 = vector.shape_cast %98 : vector<1x2x256xf32> to vector<2x256xf32>
      %100 = vector.broadcast %97 : f32 to vector<2x256xf32>
      %101 = arith.mulf %100, %99 : vector<2x256xf32>
      %102 = arith.addf %96, %101 : vector<2x256xf32>
      %c84 = arith.constant 84 : index
      %103 = memref.load %arg2[%c84] : memref<98xf32, #tpu.memory_space<smem>>
      %c1_44 = arith.constant 1 : index
      %c0_45 = arith.constant 0 : index
      %c157_46 = arith.constant 157 : index
      %104 = vector.load %arg5[%c1_44, %c0_45, %c157_46] : memref<2x2x512xf32, #tpu.memory_space<vmem>>, vector<1x2x256xf32>
      %105 = vector.shape_cast %104 : vector<1x2x256xf32> to vector<2x256xf32>
      %106 = vector.broadcast %103 : f32 to vector<2x256xf32>
      %107 = arith.mulf %106, %105 : vector<2x256xf32>
      %108 = arith.addf %102, %107 : vector<2x256xf32>
      %c91 = arith.constant 91 : index
      %109 = memref.load %arg2[%c91] : memref<98xf32, #tpu.memory_space<smem>>
      %c1_47 = arith.constant 1 : index
      %c0_48 = arith.constant 0 : index
      %c173_49 = arith.constant 173 : index
      %110 = vector.load %arg5[%c1_47, %c0_48, %c173_49] : memref<2x2x512xf32, #tpu.memory_space<vmem>>, vector<1x2x256xf32>
      %111 = vector.shape_cast %110 : vector<1x2x256xf32> to vector<2x256xf32>
      %112 = vector.broadcast %109 : f32 to vector<2x256xf32>
      %113 = arith.mulf %112, %111 : vector<2x256xf32>
      %114 = arith.addf %108, %113 : vector<2x256xf32>
      %c3_i32 = arith.constant 3 : i32
      %115 = vector.broadcast %c3_i32 : i32 to vector<2x256xi32>
      %116 = arith.cmpi sge, %28, %115 : vector<2x256xi32>
      %cst_50 = arith.constant 0.000000e+00 : f32
      %117 = vector.broadcast %cst_50 : f32 to vector<2x256xf32>
      %118 = arith.select %116, %114, %117 : vector<2x256xi1>, vector<2x256xf32>
      %119 = arith.addf %29, %118 : vector<2x256xf32>
      %cst_51 = arith.constant 0.000000e+00 : f32
      %120 = vector.broadcast %cst_51 : f32 to vector<2x256xf32>
      %c1_52 = arith.constant 1 : index
      %121 = memref.load %arg2[%c1_52] : memref<98xf32, #tpu.memory_space<smem>>
      %c0_53 = arith.constant 0 : index
      %c0_54 = arith.constant 0 : index
      %c78 = arith.constant 78 : index
      %122 = vector.load %arg5[%c0_53, %c0_54, %c78] : memref<2x2x512xf32, #tpu.memory_space<vmem>>, vector<1x2x256xf32>
      %123 = vector.shape_cast %122 : vector<1x2x256xf32> to vector<2x256xf32>
      %124 = vector.broadcast %121 : f32 to vector<2x256xf32>
      %125 = arith.mulf %124, %123 : vector<2x256xf32>
      %126 = arith.addf %120, %125 : vector<2x256xf32>
      %c8 = arith.constant 8 : index
      %127 = memref.load %arg2[%c8] : memref<98xf32, #tpu.memory_space<smem>>
      %c0_55 = arith.constant 0 : index
      %c0_56 = arith.constant 0 : index
      %c94 = arith.constant 94 : index
      %128 = vector.load %arg5[%c0_55, %c0_56, %c94] : memref<2x2x512xf32, #tpu.memory_space<vmem>>, vector<1x2x256xf32>
      %129 = vector.shape_cast %128 : vector<1x2x256xf32> to vector<2x256xf32>
      %130 = vector.broadcast %127 : f32 to vector<2x256xf32>
      %131 = arith.mulf %130, %129 : vector<2x256xf32>
      %132 = arith.addf %126, %131 : vector<2x256xf32>
      %c15 = arith.constant 15 : index
      %133 = memref.load %arg2[%c15] : memref<98xf32, #tpu.memory_space<smem>>
      %c0_57 = arith.constant 0 : index
      %c0_58 = arith.constant 0 : index
      %c110 = arith.constant 110 : index
      %134 = vector.load %arg5[%c0_57, %c0_58, %c110] : memref<2x2x512xf32, #tpu.memory_space<vmem>>, vector<1x2x256xf32>
      %135 = vector.shape_cast %134 : vector<1x2x256xf32> to vector<2x256xf32>
      %136 = vector.broadcast %133 : f32 to vector<2x256xf32>
      %137 = arith.mulf %136, %135 : vector<2x256xf32>
      %138 = arith.addf %132, %137 : vector<2x256xf32>
      %c22 = arith.constant 22 : index
      %139 = memref.load %arg2[%c22] : memref<98xf32, #tpu.memory_space<smem>>
      %c0_59 = arith.constant 0 : index
      %c0_60 = arith.constant 0 : index
      %c126 = arith.constant 126 : index
      %140 = vector.load %arg5[%c0_59, %c0_60, %c126] : memref<2x2x512xf32, #tpu.memory_space<vmem>>, vector<1x2x256xf32>
      %141 = vector.shape_cast %140 : vector<1x2x256xf32> to vector<2x256xf32>
      %142 = vector.broadcast %139 : f32 to vector<2x256xf32>
      %143 = arith.mulf %142, %141 : vector<2x256xf32>
      %144 = arith.addf %138, %143 : vector<2x256xf32>
      %c29 = arith.constant 29 : index
      %145 = memref.load %arg2[%c29] : memref<98xf32, #tpu.memory_space<smem>>
      %c0_61 = arith.constant 0 : index
      %c0_62 = arith.constant 0 : index
      %c142 = arith.constant 142 : index
      %146 = vector.load %arg5[%c0_61, %c0_62, %c142] : memref<2x2x512xf32, #tpu.memory_space<vmem>>, vector<1x2x256xf32>
      %147 = vector.shape_cast %146 : vector<1x2x256xf32> to vector<2x256xf32>
      %148 = vector.broadcast %145 : f32 to vector<2x256xf32>
      %149 = arith.mulf %148, %147 : vector<2x256xf32>
      %150 = arith.addf %144, %149 : vector<2x256xf32>
      %c36 = arith.constant 36 : index
      %151 = memref.load %arg2[%c36] : memref<98xf32, #tpu.memory_space<smem>>
      %c0_63 = arith.constant 0 : index
      %c0_64 = arith.constant 0 : index
      %c158 = arith.constant 158 : index
      %152 = vector.load %arg5[%c0_63, %c0_64, %c158] : memref<2x2x512xf32, #tpu.memory_space<vmem>>, vector<1x2x256xf32>
      %153 = vector.shape_cast %152 : vector<1x2x256xf32> to vector<2x256xf32>
      %154 = vector.broadcast %151 : f32 to vector<2x256xf32>
      %155 = arith.mulf %154, %153 : vector<2x256xf32>
      %156 = arith.addf %150, %155 : vector<2x256xf32>
      %c43 = arith.constant 43 : index
      %157 = memref.load %arg2[%c43] : memref<98xf32, #tpu.memory_space<smem>>
      %c0_65 = arith.constant 0 : index
      %c0_66 = arith.constant 0 : index
      %c174 = arith.constant 174 : index
      %158 = vector.load %arg5[%c0_65, %c0_66, %c174] : memref<2x2x512xf32, #tpu.memory_space<vmem>>, vector<1x2x256xf32>
      %159 = vector.shape_cast %158 : vector<1x2x256xf32> to vector<2x256xf32>
      %160 = vector.broadcast %157 : f32 to vector<2x256xf32>
      %161 = arith.mulf %160, %159 : vector<2x256xf32>
      %162 = arith.addf %156, %161 : vector<2x256xf32>
      %c50 = arith.constant 50 : index
      %163 = memref.load %arg2[%c50] : memref<98xf32, #tpu.memory_space<smem>>
      %c1_67 = arith.constant 1 : index
      %c0_68 = arith.constant 0 : index
      %c78_69 = arith.constant 78 : index
      %164 = vector.load %arg5[%c1_67, %c0_68, %c78_69] : memref<2x2x512xf32, #tpu.memory_space<vmem>>, vector<1x2x256xf32>
      %165 = vector.shape_cast %164 : vector<1x2x256xf32> to vector<2x256xf32>
      %166 = vector.broadcast %163 : f32 to vector<2x256xf32>
      %167 = arith.mulf %166, %165 : vector<2x256xf32>
      %168 = arith.addf %162, %167 : vector<2x256xf32>
      %c57 = arith.constant 57 : index
      %169 = memref.load %arg2[%c57] : memref<98xf32, #tpu.memory_space<smem>>
      %c1_70 = arith.constant 1 : index
      %c0_71 = arith.constant 0 : index
      %c94_72 = arith.constant 94 : index
      %170 = vector.load %arg5[%c1_70, %c0_71, %c94_72] : memref<2x2x512xf32, #tpu.memory_space<vmem>>, vector<1x2x256xf32>
      %171 = vector.shape_cast %170 : vector<1x2x256xf32> to vector<2x256xf32>
      %172 = vector.broadcast %169 : f32 to vector<2x256xf32>
      %173 = arith.mulf %172, %171 : vector<2x256xf32>
      %174 = arith.addf %168, %173 : vector<2x256xf32>
      %c64 = arith.constant 64 : index
      %175 = memref.load %arg2[%c64] : memref<98xf32, #tpu.memory_space<smem>>
      %c1_73 = arith.constant 1 : index
      %c0_74 = arith.constant 0 : index
      %c110_75 = arith.constant 110 : index
      %176 = vector.load %arg5[%c1_73, %c0_74, %c110_75] : memref<2x2x512xf32, #tpu.memory_space<vmem>>, vector<1x2x256xf32>
      %177 = vector.shape_cast %176 : vector<1x2x256xf32> to vector<2x256xf32>
      %178 = vector.broadcast %175 : f32 to vector<2x256xf32>
      %179 = arith.mulf %178, %177 : vector<2x256xf32>
      %180 = arith.addf %174, %179 : vector<2x256xf32>
      %c71 = arith.constant 71 : index
      %181 = memref.load %arg2[%c71] : memref<98xf32, #tpu.memory_space<smem>>
      %c1_76 = arith.constant 1 : index
      %c0_77 = arith.constant 0 : index
      %c126_78 = arith.constant 126 : index
      %182 = vector.load %arg5[%c1_76, %c0_77, %c126_78] : memref<2x2x512xf32, #tpu.memory_space<vmem>>, vector<1x2x256xf32>
      %183 = vector.shape_cast %182 : vector<1x2x256xf32> to vector<2x256xf32>
      %184 = vector.broadcast %181 : f32 to vector<2x256xf32>
      %185 = arith.mulf %184, %183 : vector<2x256xf32>
      %186 = arith.addf %180, %185 : vector<2x256xf32>
      %c78_79 = arith.constant 78 : index
      %187 = memref.load %arg2[%c78_79] : memref<98xf32, #tpu.memory_space<smem>>
      %c1_80 = arith.constant 1 : index
      %c0_81 = arith.constant 0 : index
      %c142_82 = arith.constant 142 : index
      %188 = vector.load %arg5[%c1_80, %c0_81, %c142_82] : memref<2x2x512xf32, #tpu.memory_space<vmem>>, vector<1x2x256xf32>
      %189 = vector.shape_cast %188 : vector<1x2x256xf32> to vector<2x256xf32>
      %190 = vector.broadcast %187 : f32 to vector<2x256xf32>
      %191 = arith.mulf %190, %189 : vector<2x256xf32>
      %192 = arith.addf %186, %191 : vector<2x256xf32>
      %c85 = arith.constant 85 : index
      %193 = memref.load %arg2[%c85] : memref<98xf32, #tpu.memory_space<smem>>
      %c1_83 = arith.constant 1 : index
      %c0_84 = arith.constant 0 : index
      %c158_85 = arith.constant 158 : index
      %194 = vector.load %arg5[%c1_83, %c0_84, %c158_85] : memref<2x2x512xf32, #tpu.memory_space<vmem>>, vector<1x2x256xf32>
      %195 = vector.shape_cast %194 : vector<1x2x256xf32> to vector<2x256xf32>
      %196 = vector.broadcast %193 : f32 to vector<2x256xf32>
      %197 = arith.mulf %196, %195 : vector<2x256xf32>
      %198 = arith.addf %192, %197 : vector<2x256xf32>
      %c92 = arith.constant 92 : index
      %199 = memref.load %arg2[%c92] : memref<98xf32, #tpu.memory_space<smem>>
      %c1_86 = arith.constant 1 : index
      %c0_87 = arith.constant 0 : index
      %c174_88 = arith.constant 174 : index
      %200 = vector.load %arg5[%c1_86, %c0_87, %c174_88] : memref<2x2x512xf32, #tpu.memory_space<vmem>>, vector<1x2x256xf32>
      %201 = vector.shape_cast %200 : vector<1x2x256xf32> to vector<2x256xf32>
      %202 = vector.broadcast %199 : f32 to vector<2x256xf32>
      %203 = arith.mulf %202, %201 : vector<2x256xf32>
      %204 = arith.addf %198, %203 : vector<2x256xf32>
      %c2_i32 = arith.constant 2 : i32
      %205 = vector.broadcast %c2_i32 : i32 to vector<2x256xi32>
      %206 = arith.cmpi sge, %28, %205 : vector<2x256xi32>
      %cst_89 = arith.constant 0.000000e+00 : f32
      %207 = vector.broadcast %cst_89 : f32 to vector<2x256xf32>
      %208 = arith.select %206, %204, %207 : vector<2x256xi1>, vector<2x256xf32>
      %209 = arith.addf %119, %208 : vector<2x256xf32>
      %cst_90 = arith.constant 0.000000e+00 : f32
      %210 = vector.broadcast %cst_90 : f32 to vector<2x256xf32>
      %c2 = arith.constant 2 : index
      %211 = memref.load %arg2[%c2] : memref<98xf32, #tpu.memory_space<smem>>
      %c0_91 = arith.constant 0 : index
      %c0_92 = arith.constant 0 : index
      %c79 = arith.constant 79 : index
      %212 = vector.load %arg5[%c0_91, %c0_92, %c79] : memref<2x2x512xf32, #tpu.memory_space<vmem>>, vector<1x2x256xf32>
      %213 = vector.shape_cast %212 : vector<1x2x256xf32> to vector<2x256xf32>
      %214 = vector.broadcast %211 : f32 to vector<2x256xf32>
      %215 = arith.mulf %214, %213 : vector<2x256xf32>
      %216 = arith.addf %210, %215 : vector<2x256xf32>
      %c9 = arith.constant 9 : index
      %217 = memref.load %arg2[%c9] : memref<98xf32, #tpu.memory_space<smem>>
      %c0_93 = arith.constant 0 : index
      %c0_94 = arith.constant 0 : index
      %c95 = arith.constant 95 : index
      %218 = vector.load %arg5[%c0_93, %c0_94, %c95] : memref<2x2x512xf32, #tpu.memory_space<vmem>>, vector<1x2x256xf32>
      %219 = vector.shape_cast %218 : vector<1x2x256xf32> to vector<2x256xf32>
      %220 = vector.broadcast %217 : f32 to vector<2x256xf32>
      %221 = arith.mulf %220, %219 : vector<2x256xf32>
      %222 = arith.addf %216, %221 : vector<2x256xf32>
      %c16 = arith.constant 16 : index
      %223 = memref.load %arg2[%c16] : memref<98xf32, #tpu.memory_space<smem>>
      %c0_95 = arith.constant 0 : index
      %c0_96 = arith.constant 0 : index
      %c111 = arith.constant 111 : index
      %224 = vector.load %arg5[%c0_95, %c0_96, %c111] : memref<2x2x512xf32, #tpu.memory_space<vmem>>, vector<1x2x256xf32>
      %225 = vector.shape_cast %224 : vector<1x2x256xf32> to vector<2x256xf32>
      %226 = vector.broadcast %223 : f32 to vector<2x256xf32>
      %227 = arith.mulf %226, %225 : vector<2x256xf32>
      %228 = arith.addf %222, %227 : vector<2x256xf32>
      %c23 = arith.constant 23 : index
      %229 = memref.load %arg2[%c23] : memref<98xf32, #tpu.memory_space<smem>>
      %c0_97 = arith.constant 0 : index
      %c0_98 = arith.constant 0 : index
      %c127 = arith.constant 127 : index
      %230 = vector.load %arg5[%c0_97, %c0_98, %c127] : memref<2x2x512xf32, #tpu.memory_space<vmem>>, vector<1x2x256xf32>
      %231 = vector.shape_cast %230 : vector<1x2x256xf32> to vector<2x256xf32>
      %232 = vector.broadcast %229 : f32 to vector<2x256xf32>
      %233 = arith.mulf %232, %231 : vector<2x256xf32>
      %234 = arith.addf %228, %233 : vector<2x256xf32>
      %c30 = arith.constant 30 : index
      %235 = memref.load %arg2[%c30] : memref<98xf32, #tpu.memory_space<smem>>
      %c0_99 = arith.constant 0 : index
      %c0_100 = arith.constant 0 : index
      %c143 = arith.constant 143 : index
      %236 = vector.load %arg5[%c0_99, %c0_100, %c143] : memref<2x2x512xf32, #tpu.memory_space<vmem>>, vector<1x2x256xf32>
      %237 = vector.shape_cast %236 : vector<1x2x256xf32> to vector<2x256xf32>
      %238 = vector.broadcast %235 : f32 to vector<2x256xf32>
      %239 = arith.mulf %238, %237 : vector<2x256xf32>
      %240 = arith.addf %234, %239 : vector<2x256xf32>
      %c37 = arith.constant 37 : index
      %241 = memref.load %arg2[%c37] : memref<98xf32, #tpu.memory_space<smem>>
      %c0_101 = arith.constant 0 : index
      %c0_102 = arith.constant 0 : index
      %c159 = arith.constant 159 : index
      %242 = vector.load %arg5[%c0_101, %c0_102, %c159] : memref<2x2x512xf32, #tpu.memory_space<vmem>>, vector<1x2x256xf32>
      %243 = vector.shape_cast %242 : vector<1x2x256xf32> to vector<2x256xf32>
      %244 = vector.broadcast %241 : f32 to vector<2x256xf32>
      %245 = arith.mulf %244, %243 : vector<2x256xf32>
      %246 = arith.addf %240, %245 : vector<2x256xf32>
      %c44 = arith.constant 44 : index
      %247 = memref.load %arg2[%c44] : memref<98xf32, #tpu.memory_space<smem>>
      %c0_103 = arith.constant 0 : index
      %c0_104 = arith.constant 0 : index
      %c175 = arith.constant 175 : index
      %248 = vector.load %arg5[%c0_103, %c0_104, %c175] : memref<2x2x512xf32, #tpu.memory_space<vmem>>, vector<1x2x256xf32>
      %249 = vector.shape_cast %248 : vector<1x2x256xf32> to vector<2x256xf32>
      %250 = vector.broadcast %247 : f32 to vector<2x256xf32>
      %251 = arith.mulf %250, %249 : vector<2x256xf32>
      %252 = arith.addf %246, %251 : vector<2x256xf32>
      %c51 = arith.constant 51 : index
      %253 = memref.load %arg2[%c51] : memref<98xf32, #tpu.memory_space<smem>>
      %c1_105 = arith.constant 1 : index
      %c0_106 = arith.constant 0 : index
      %c79_107 = arith.constant 79 : index
      %254 = vector.load %arg5[%c1_105, %c0_106, %c79_107] : memref<2x2x512xf32, #tpu.memory_space<vmem>>, vector<1x2x256xf32>
      %255 = vector.shape_cast %254 : vector<1x2x256xf32> to vector<2x256xf32>
      %256 = vector.broadcast %253 : f32 to vector<2x256xf32>
      %257 = arith.mulf %256, %255 : vector<2x256xf32>
      %258 = arith.addf %252, %257 : vector<2x256xf32>
      %c58 = arith.constant 58 : index
      %259 = memref.load %arg2[%c58] : memref<98xf32, #tpu.memory_space<smem>>
      %c1_108 = arith.constant 1 : index
      %c0_109 = arith.constant 0 : index
      %c95_110 = arith.constant 95 : index
      %260 = vector.load %arg5[%c1_108, %c0_109, %c95_110] : memref<2x2x512xf32, #tpu.memory_space<vmem>>, vector<1x2x256xf32>
      %261 = vector.shape_cast %260 : vector<1x2x256xf32> to vector<2x256xf32>
      %262 = vector.broadcast %259 : f32 to vector<2x256xf32>
      %263 = arith.mulf %262, %261 : vector<2x256xf32>
      %264 = arith.addf %258, %263 : vector<2x256xf32>
      %c65 = arith.constant 65 : index
      %265 = memref.load %arg2[%c65] : memref<98xf32, #tpu.memory_space<smem>>
      %c1_111 = arith.constant 1 : index
      %c0_112 = arith.constant 0 : index
      %c111_113 = arith.constant 111 : index
      %266 = vector.load %arg5[%c1_111, %c0_112, %c111_113] : memref<2x2x512xf32, #tpu.memory_space<vmem>>, vector<1x2x256xf32>
      %267 = vector.shape_cast %266 : vector<1x2x256xf32> to vector<2x256xf32>
      %268 = vector.broadcast %265 : f32 to vector<2x256xf32>
      %269 = arith.mulf %268, %267 : vector<2x256xf32>
      %270 = arith.addf %264, %269 : vector<2x256xf32>
      %c72 = arith.constant 72 : index
      %271 = memref.load %arg2[%c72] : memref<98xf32, #tpu.memory_space<smem>>
      %c1_114 = arith.constant 1 : index
      %c0_115 = arith.constant 0 : index
      %c127_116 = arith.constant 127 : index
      %272 = vector.load %arg5[%c1_114, %c0_115, %c127_116] : memref<2x2x512xf32, #tpu.memory_space<vmem>>, vector<1x2x256xf32>
      %273 = vector.shape_cast %272 : vector<1x2x256xf32> to vector<2x256xf32>
      %274 = vector.broadcast %271 : f32 to vector<2x256xf32>
      %275 = arith.mulf %274, %273 : vector<2x256xf32>
      %276 = arith.addf %270, %275 : vector<2x256xf32>
      %c79_117 = arith.constant 79 : index
      %277 = memref.load %arg2[%c79_117] : memref<98xf32, #tpu.memory_space<smem>>
      %c1_118 = arith.constant 1 : index
      %c0_119 = arith.constant 0 : index
      %c143_120 = arith.constant 143 : index
      %278 = vector.load %arg5[%c1_118, %c0_119, %c143_120] : memref<2x2x512xf32, #tpu.memory_space<vmem>>, vector<1x2x256xf32>
      %279 = vector.shape_cast %278 : vector<1x2x256xf32> to vector<2x256xf32>
      %280 = vector.broadcast %277 : f32 to vector<2x256xf32>
      %281 = arith.mulf %280, %279 : vector<2x256xf32>
      %282 = arith.addf %276, %281 : vector<2x256xf32>
      %c86 = arith.constant 86 : index
      %283 = memref.load %arg2[%c86] : memref<98xf32, #tpu.memory_space<smem>>
      %c1_121 = arith.constant 1 : index
      %c0_122 = arith.constant 0 : index
      %c159_123 = arith.constant 159 : index
      %284 = vector.load %arg5[%c1_121, %c0_122, %c159_123] : memref<2x2x512xf32, #tpu.memory_space<vmem>>, vector<1x2x256xf32>
      %285 = vector.shape_cast %284 : vector<1x2x256xf32> to vector<2x256xf32>
      %286 = vector.broadcast %283 : f32 to vector<2x256xf32>
      %287 = arith.mulf %286, %285 : vector<2x256xf32>
      %288 = arith.addf %282, %287 : vector<2x256xf32>
      %c93_124 = arith.constant 93 : index
      %289 = memref.load %arg2[%c93_124] : memref<98xf32, #tpu.memory_space<smem>>
      %c1_125 = arith.constant 1 : index
      %c0_126 = arith.constant 0 : index
      %c175_127 = arith.constant 175 : index
      %290 = vector.load %arg5[%c1_125, %c0_126, %c175_127] : memref<2x2x512xf32, #tpu.memory_space<vmem>>, vector<1x2x256xf32>
      %291 = vector.shape_cast %290 : vector<1x2x256xf32> to vector<2x256xf32>
      %292 = vector.broadcast %289 : f32 to vector<2x256xf32>
      %293 = arith.mulf %292, %291 : vector<2x256xf32>
      %294 = arith.addf %288, %293 : vector<2x256xf32>
      %c1_i32_128 = arith.constant 1 : i32
      %295 = vector.broadcast %c1_i32_128 : i32 to vector<2x256xi32>
      %296 = arith.cmpi sge, %28, %295 : vector<2x256xi32>
      %cst_129 = arith.constant 0.000000e+00 : f32
      %297 = vector.broadcast %cst_129 : f32 to vector<2x256xf32>
      %298 = arith.select %296, %294, %297 : vector<2x256xi1>, vector<2x256xf32>
      %299 = arith.addf %209, %298 : vector<2x256xf32>
      %cst_130 = arith.constant 0.000000e+00 : f32
      %300 = vector.broadcast %cst_130 : f32 to vector<2x256xf32>
      %c3 = arith.constant 3 : index
      %301 = memref.load %arg2[%c3] : memref<98xf32, #tpu.memory_space<smem>>
      %c0_131 = arith.constant 0 : index
      %c0_132 = arith.constant 0 : index
      %c80 = arith.constant 80 : index
      %302 = vector.load %arg5[%c0_131, %c0_132, %c80] : memref<2x2x512xf32, #tpu.memory_space<vmem>>, vector<1x2x256xf32>
      %303 = vector.shape_cast %302 : vector<1x2x256xf32> to vector<2x256xf32>
      %304 = vector.broadcast %301 : f32 to vector<2x256xf32>
      %305 = arith.mulf %304, %303 : vector<2x256xf32>
      %306 = arith.addf %300, %305 : vector<2x256xf32>
      %c10 = arith.constant 10 : index
      %307 = memref.load %arg2[%c10] : memref<98xf32, #tpu.memory_space<smem>>
      %c0_133 = arith.constant 0 : index
      %c0_134 = arith.constant 0 : index
      %c96 = arith.constant 96 : index
      %308 = vector.load %arg5[%c0_133, %c0_134, %c96] : memref<2x2x512xf32, #tpu.memory_space<vmem>>, vector<1x2x256xf32>
      %309 = vector.shape_cast %308 : vector<1x2x256xf32> to vector<2x256xf32>
      %310 = vector.broadcast %307 : f32 to vector<2x256xf32>
      %311 = arith.mulf %310, %309 : vector<2x256xf32>
      %312 = arith.addf %306, %311 : vector<2x256xf32>
      %c17 = arith.constant 17 : index
      %313 = memref.load %arg2[%c17] : memref<98xf32, #tpu.memory_space<smem>>
      %c0_135 = arith.constant 0 : index
      %c0_136 = arith.constant 0 : index
      %c112 = arith.constant 112 : index
      %314 = vector.load %arg5[%c0_135, %c0_136, %c112] : memref<2x2x512xf32, #tpu.memory_space<vmem>>, vector<1x2x256xf32>
      %315 = vector.shape_cast %314 : vector<1x2x256xf32> to vector<2x256xf32>
      %316 = vector.broadcast %313 : f32 to vector<2x256xf32>
      %317 = arith.mulf %316, %315 : vector<2x256xf32>
      %318 = arith.addf %312, %317 : vector<2x256xf32>
      %c24 = arith.constant 24 : index
      %319 = memref.load %arg2[%c24] : memref<98xf32, #tpu.memory_space<smem>>
      %c0_137 = arith.constant 0 : index
      %c0_138 = arith.constant 0 : index
      %c128 = arith.constant 128 : index
      %320 = vector.load %arg5[%c0_137, %c0_138, %c128] : memref<2x2x512xf32, #tpu.memory_space<vmem>>, vector<1x2x256xf32>
      %321 = vector.shape_cast %320 : vector<1x2x256xf32> to vector<2x256xf32>
      %322 = vector.broadcast %319 : f32 to vector<2x256xf32>
      %323 = arith.mulf %322, %321 : vector<2x256xf32>
      %324 = arith.addf %318, %323 : vector<2x256xf32>
      %c31 = arith.constant 31 : index
      %325 = memref.load %arg2[%c31] : memref<98xf32, #tpu.memory_space<smem>>
      %c0_139 = arith.constant 0 : index
      %c0_140 = arith.constant 0 : index
      %c144 = arith.constant 144 : index
      %326 = vector.load %arg5[%c0_139, %c0_140, %c144] : memref<2x2x512xf32, #tpu.memory_space<vmem>>, vector<1x2x256xf32>
      %327 = vector.shape_cast %326 : vector<1x2x256xf32> to vector<2x256xf32>
      %328 = vector.broadcast %325 : f32 to vector<2x256xf32>
      %329 = arith.mulf %328, %327 : vector<2x256xf32>
      %330 = arith.addf %324, %329 : vector<2x256xf32>
      %c38 = arith.constant 38 : index
      %331 = memref.load %arg2[%c38] : memref<98xf32, #tpu.memory_space<smem>>
      %c0_141 = arith.constant 0 : index
      %c0_142 = arith.constant 0 : index
      %c160 = arith.constant 160 : index
      %332 = vector.load %arg5[%c0_141, %c0_142, %c160] : memref<2x2x512xf32, #tpu.memory_space<vmem>>, vector<1x2x256xf32>
      %333 = vector.shape_cast %332 : vector<1x2x256xf32> to vector<2x256xf32>
      %334 = vector.broadcast %331 : f32 to vector<2x256xf32>
      %335 = arith.mulf %334, %333 : vector<2x256xf32>
      %336 = arith.addf %330, %335 : vector<2x256xf32>
      %c45 = arith.constant 45 : index
      %337 = memref.load %arg2[%c45] : memref<98xf32, #tpu.memory_space<smem>>
      %c0_143 = arith.constant 0 : index
      %c0_144 = arith.constant 0 : index
      %c176 = arith.constant 176 : index
      %338 = vector.load %arg5[%c0_143, %c0_144, %c176] : memref<2x2x512xf32, #tpu.memory_space<vmem>>, vector<1x2x256xf32>
      %339 = vector.shape_cast %338 : vector<1x2x256xf32> to vector<2x256xf32>
      %340 = vector.broadcast %337 : f32 to vector<2x256xf32>
      %341 = arith.mulf %340, %339 : vector<2x256xf32>
      %342 = arith.addf %336, %341 : vector<2x256xf32>
      %c52 = arith.constant 52 : index
      %343 = memref.load %arg2[%c52] : memref<98xf32, #tpu.memory_space<smem>>
      %c1_145 = arith.constant 1 : index
      %c0_146 = arith.constant 0 : index
      %c80_147 = arith.constant 80 : index
      %344 = vector.load %arg5[%c1_145, %c0_146, %c80_147] : memref<2x2x512xf32, #tpu.memory_space<vmem>>, vector<1x2x256xf32>
      %345 = vector.shape_cast %344 : vector<1x2x256xf32> to vector<2x256xf32>
      %346 = vector.broadcast %343 : f32 to vector<2x256xf32>
      %347 = arith.mulf %346, %345 : vector<2x256xf32>
      %348 = arith.addf %342, %347 : vector<2x256xf32>
      %c59 = arith.constant 59 : index
      %349 = memref.load %arg2[%c59] : memref<98xf32, #tpu.memory_space<smem>>
      %c1_148 = arith.constant 1 : index
      %c0_149 = arith.constant 0 : index
      %c96_150 = arith.constant 96 : index
      %350 = vector.load %arg5[%c1_148, %c0_149, %c96_150] : memref<2x2x512xf32, #tpu.memory_space<vmem>>, vector<1x2x256xf32>
      %351 = vector.shape_cast %350 : vector<1x2x256xf32> to vector<2x256xf32>
      %352 = vector.broadcast %349 : f32 to vector<2x256xf32>
      %353 = arith.mulf %352, %351 : vector<2x256xf32>
      %354 = arith.addf %348, %353 : vector<2x256xf32>
      %c66 = arith.constant 66 : index
      %355 = memref.load %arg2[%c66] : memref<98xf32, #tpu.memory_space<smem>>
      %c1_151 = arith.constant 1 : index
      %c0_152 = arith.constant 0 : index
      %c112_153 = arith.constant 112 : index
      %356 = vector.load %arg5[%c1_151, %c0_152, %c112_153] : memref<2x2x512xf32, #tpu.memory_space<vmem>>, vector<1x2x256xf32>
      %357 = vector.shape_cast %356 : vector<1x2x256xf32> to vector<2x256xf32>
      %358 = vector.broadcast %355 : f32 to vector<2x256xf32>
      %359 = arith.mulf %358, %357 : vector<2x256xf32>
      %360 = arith.addf %354, %359 : vector<2x256xf32>
      %c73 = arith.constant 73 : index
      %361 = memref.load %arg2[%c73] : memref<98xf32, #tpu.memory_space<smem>>
      %c1_154 = arith.constant 1 : index
      %c0_155 = arith.constant 0 : index
      %c128_156 = arith.constant 128 : index
      %362 = vector.load %arg5[%c1_154, %c0_155, %c128_156] : memref<2x2x512xf32, #tpu.memory_space<vmem>>, vector<1x2x256xf32>
      %363 = vector.shape_cast %362 : vector<1x2x256xf32> to vector<2x256xf32>
      %364 = vector.broadcast %361 : f32 to vector<2x256xf32>
      %365 = arith.mulf %364, %363 : vector<2x256xf32>
      %366 = arith.addf %360, %365 : vector<2x256xf32>
      %c80_157 = arith.constant 80 : index
      %367 = memref.load %arg2[%c80_157] : memref<98xf32, #tpu.memory_space<smem>>
      %c1_158 = arith.constant 1 : index
      %c0_159 = arith.constant 0 : index
      %c144_160 = arith.constant 144 : index
      %368 = vector.load %arg5[%c1_158, %c0_159, %c144_160] : memref<2x2x512xf32, #tpu.memory_space<vmem>>, vector<1x2x256xf32>
      %369 = vector.shape_cast %368 : vector<1x2x256xf32> to vector<2x256xf32>
      %370 = vector.broadcast %367 : f32 to vector<2x256xf32>
      %371 = arith.mulf %370, %369 : vector<2x256xf32>
      %372 = arith.addf %366, %371 : vector<2x256xf32>
      %c87 = arith.constant 87 : index
      %373 = memref.load %arg2[%c87] : memref<98xf32, #tpu.memory_space<smem>>
      %c1_161 = arith.constant 1 : index
      %c0_162 = arith.constant 0 : index
      %c160_163 = arith.constant 160 : index
      %374 = vector.load %arg5[%c1_161, %c0_162, %c160_163] : memref<2x2x512xf32, #tpu.memory_space<vmem>>, vector<1x2x256xf32>
      %375 = vector.shape_cast %374 : vector<1x2x256xf32> to vector<2x256xf32>
      %376 = vector.broadcast %373 : f32 to vector<2x256xf32>
      %377 = arith.mulf %376, %375 : vector<2x256xf32>
      %378 = arith.addf %372, %377 : vector<2x256xf32>
      %c94_164 = arith.constant 94 : index
      %379 = memref.load %arg2[%c94_164] : memref<98xf32, #tpu.memory_space<smem>>
      %c1_165 = arith.constant 1 : index
      %c0_166 = arith.constant 0 : index
      %c176_167 = arith.constant 176 : index
      %380 = vector.load %arg5[%c1_165, %c0_166, %c176_167] : memref<2x2x512xf32, #tpu.memory_space<vmem>>, vector<1x2x256xf32>
      %381 = vector.shape_cast %380 : vector<1x2x256xf32> to vector<2x256xf32>
      %382 = vector.broadcast %379 : f32 to vector<2x256xf32>
      %383 = arith.mulf %382, %381 : vector<2x256xf32>
      %384 = arith.addf %378, %383 : vector<2x256xf32>
      %385 = arith.addf %299, %384 : vector<2x256xf32>
      %cst_168 = arith.constant 0.000000e+00 : f32
      %386 = vector.broadcast %cst_168 : f32 to vector<2x256xf32>
      %c4 = arith.constant 4 : index
      %387 = memref.load %arg2[%c4] : memref<98xf32, #tpu.memory_space<smem>>
      %c0_169 = arith.constant 0 : index
      %c0_170 = arith.constant 0 : index
      %c81 = arith.constant 81 : index
      %388 = vector.load %arg5[%c0_169, %c0_170, %c81] : memref<2x2x512xf32, #tpu.memory_space<vmem>>, vector<1x2x256xf32>
      %389 = vector.shape_cast %388 : vector<1x2x256xf32> to vector<2x256xf32>
      %390 = vector.broadcast %387 : f32 to vector<2x256xf32>
      %391 = arith.mulf %390, %389 : vector<2x256xf32>
      %392 = arith.addf %386, %391 : vector<2x256xf32>
      %c11 = arith.constant 11 : index
      %393 = memref.load %arg2[%c11] : memref<98xf32, #tpu.memory_space<smem>>
      %c0_171 = arith.constant 0 : index
      %c0_172 = arith.constant 0 : index
      %c97 = arith.constant 97 : index
      %394 = vector.load %arg5[%c0_171, %c0_172, %c97] : memref<2x2x512xf32, #tpu.memory_space<vmem>>, vector<1x2x256xf32>
      %395 = vector.shape_cast %394 : vector<1x2x256xf32> to vector<2x256xf32>
      %396 = vector.broadcast %393 : f32 to vector<2x256xf32>
      %397 = arith.mulf %396, %395 : vector<2x256xf32>
      %398 = arith.addf %392, %397 : vector<2x256xf32>
      %c18 = arith.constant 18 : index
      %399 = memref.load %arg2[%c18] : memref<98xf32, #tpu.memory_space<smem>>
      %c0_173 = arith.constant 0 : index
      %c0_174 = arith.constant 0 : index
      %c113 = arith.constant 113 : index
      %400 = vector.load %arg5[%c0_173, %c0_174, %c113] : memref<2x2x512xf32, #tpu.memory_space<vmem>>, vector<1x2x256xf32>
      %401 = vector.shape_cast %400 : vector<1x2x256xf32> to vector<2x256xf32>
      %402 = vector.broadcast %399 : f32 to vector<2x256xf32>
      %403 = arith.mulf %402, %401 : vector<2x256xf32>
      %404 = arith.addf %398, %403 : vector<2x256xf32>
      %c25 = arith.constant 25 : index
      %405 = memref.load %arg2[%c25] : memref<98xf32, #tpu.memory_space<smem>>
      %c0_175 = arith.constant 0 : index
      %c0_176 = arith.constant 0 : index
      %c129 = arith.constant 129 : index
      %406 = vector.load %arg5[%c0_175, %c0_176, %c129] : memref<2x2x512xf32, #tpu.memory_space<vmem>>, vector<1x2x256xf32>
      %407 = vector.shape_cast %406 : vector<1x2x256xf32> to vector<2x256xf32>
      %408 = vector.broadcast %405 : f32 to vector<2x256xf32>
      %409 = arith.mulf %408, %407 : vector<2x256xf32>
      %410 = arith.addf %404, %409 : vector<2x256xf32>
      %c32 = arith.constant 32 : index
      %411 = memref.load %arg2[%c32] : memref<98xf32, #tpu.memory_space<smem>>
      %c0_177 = arith.constant 0 : index
      %c0_178 = arith.constant 0 : index
      %c145 = arith.constant 145 : index
      %412 = vector.load %arg5[%c0_177, %c0_178, %c145] : memref<2x2x512xf32, #tpu.memory_space<vmem>>, vector<1x2x256xf32>
      %413 = vector.shape_cast %412 : vector<1x2x256xf32> to vector<2x256xf32>
      %414 = vector.broadcast %411 : f32 to vector<2x256xf32>
      %415 = arith.mulf %414, %413 : vector<2x256xf32>
      %416 = arith.addf %410, %415 : vector<2x256xf32>
      %c39 = arith.constant 39 : index
      %417 = memref.load %arg2[%c39] : memref<98xf32, #tpu.memory_space<smem>>
      %c0_179 = arith.constant 0 : index
      %c0_180 = arith.constant 0 : index
      %c161 = arith.constant 161 : index
      %418 = vector.load %arg5[%c0_179, %c0_180, %c161] : memref<2x2x512xf32, #tpu.memory_space<vmem>>, vector<1x2x256xf32>
      %419 = vector.shape_cast %418 : vector<1x2x256xf32> to vector<2x256xf32>
      %420 = vector.broadcast %417 : f32 to vector<2x256xf32>
      %421 = arith.mulf %420, %419 : vector<2x256xf32>
      %422 = arith.addf %416, %421 : vector<2x256xf32>
      %c46 = arith.constant 46 : index
      %423 = memref.load %arg2[%c46] : memref<98xf32, #tpu.memory_space<smem>>
      %c0_181 = arith.constant 0 : index
      %c0_182 = arith.constant 0 : index
      %c177 = arith.constant 177 : index
      %424 = vector.load %arg5[%c0_181, %c0_182, %c177] : memref<2x2x512xf32, #tpu.memory_space<vmem>>, vector<1x2x256xf32>
      %425 = vector.shape_cast %424 : vector<1x2x256xf32> to vector<2x256xf32>
      %426 = vector.broadcast %423 : f32 to vector<2x256xf32>
      %427 = arith.mulf %426, %425 : vector<2x256xf32>
      %428 = arith.addf %422, %427 : vector<2x256xf32>
      %c53 = arith.constant 53 : index
      %429 = memref.load %arg2[%c53] : memref<98xf32, #tpu.memory_space<smem>>
      %c1_183 = arith.constant 1 : index
      %c0_184 = arith.constant 0 : index
      %c81_185 = arith.constant 81 : index
      %430 = vector.load %arg5[%c1_183, %c0_184, %c81_185] : memref<2x2x512xf32, #tpu.memory_space<vmem>>, vector<1x2x256xf32>
      %431 = vector.shape_cast %430 : vector<1x2x256xf32> to vector<2x256xf32>
      %432 = vector.broadcast %429 : f32 to vector<2x256xf32>
      %433 = arith.mulf %432, %431 : vector<2x256xf32>
      %434 = arith.addf %428, %433 : vector<2x256xf32>
      %c60 = arith.constant 60 : index
      %435 = memref.load %arg2[%c60] : memref<98xf32, #tpu.memory_space<smem>>
      %c1_186 = arith.constant 1 : index
      %c0_187 = arith.constant 0 : index
      %c97_188 = arith.constant 97 : index
      %436 = vector.load %arg5[%c1_186, %c0_187, %c97_188] : memref<2x2x512xf32, #tpu.memory_space<vmem>>, vector<1x2x256xf32>
      %437 = vector.shape_cast %436 : vector<1x2x256xf32> to vector<2x256xf32>
      %438 = vector.broadcast %435 : f32 to vector<2x256xf32>
      %439 = arith.mulf %438, %437 : vector<2x256xf32>
      %440 = arith.addf %434, %439 : vector<2x256xf32>
      %c67 = arith.constant 67 : index
      %441 = memref.load %arg2[%c67] : memref<98xf32, #tpu.memory_space<smem>>
      %c1_189 = arith.constant 1 : index
      %c0_190 = arith.constant 0 : index
      %c113_191 = arith.constant 113 : index
      %442 = vector.load %arg5[%c1_189, %c0_190, %c113_191] : memref<2x2x512xf32, #tpu.memory_space<vmem>>, vector<1x2x256xf32>
      %443 = vector.shape_cast %442 : vector<1x2x256xf32> to vector<2x256xf32>
      %444 = vector.broadcast %441 : f32 to vector<2x256xf32>
      %445 = arith.mulf %444, %443 : vector<2x256xf32>
      %446 = arith.addf %440, %445 : vector<2x256xf32>
      %c74 = arith.constant 74 : index
      %447 = memref.load %arg2[%c74] : memref<98xf32, #tpu.memory_space<smem>>
      %c1_192 = arith.constant 1 : index
      %c0_193 = arith.constant 0 : index
      %c129_194 = arith.constant 129 : index
      %448 = vector.load %arg5[%c1_192, %c0_193, %c129_194] : memref<2x2x512xf32, #tpu.memory_space<vmem>>, vector<1x2x256xf32>
      %449 = vector.shape_cast %448 : vector<1x2x256xf32> to vector<2x256xf32>
      %450 = vector.broadcast %447 : f32 to vector<2x256xf32>
      %451 = arith.mulf %450, %449 : vector<2x256xf32>
      %452 = arith.addf %446, %451 : vector<2x256xf32>
      %c81_195 = arith.constant 81 : index
      %453 = memref.load %arg2[%c81_195] : memref<98xf32, #tpu.memory_space<smem>>
      %c1_196 = arith.constant 1 : index
      %c0_197 = arith.constant 0 : index
      %c145_198 = arith.constant 145 : index
      %454 = vector.load %arg5[%c1_196, %c0_197, %c145_198] : memref<2x2x512xf32, #tpu.memory_space<vmem>>, vector<1x2x256xf32>
      %455 = vector.shape_cast %454 : vector<1x2x256xf32> to vector<2x256xf32>
      %456 = vector.broadcast %453 : f32 to vector<2x256xf32>
      %457 = arith.mulf %456, %455 : vector<2x256xf32>
      %458 = arith.addf %452, %457 : vector<2x256xf32>
      %c88 = arith.constant 88 : index
      %459 = memref.load %arg2[%c88] : memref<98xf32, #tpu.memory_space<smem>>
      %c1_199 = arith.constant 1 : index
      %c0_200 = arith.constant 0 : index
      %c161_201 = arith.constant 161 : index
      %460 = vector.load %arg5[%c1_199, %c0_200, %c161_201] : memref<2x2x512xf32, #tpu.memory_space<vmem>>, vector<1x2x256xf32>
      %461 = vector.shape_cast %460 : vector<1x2x256xf32> to vector<2x256xf32>
      %462 = vector.broadcast %459 : f32 to vector<2x256xf32>
      %463 = arith.mulf %462, %461 : vector<2x256xf32>
      %464 = arith.addf %458, %463 : vector<2x256xf32>
      %c95_202 = arith.constant 95 : index
      %465 = memref.load %arg2[%c95_202] : memref<98xf32, #tpu.memory_space<smem>>
      %c1_203 = arith.constant 1 : index
      %c0_204 = arith.constant 0 : index
      %c177_205 = arith.constant 177 : index
      %466 = vector.load %arg5[%c1_203, %c0_204, %c177_205] : memref<2x2x512xf32, #tpu.memory_space<vmem>>, vector<1x2x256xf32>
      %467 = vector.shape_cast %466 : vector<1x2x256xf32> to vector<2x256xf32>
      %468 = vector.broadcast %465 : f32 to vector<2x256xf32>
      %469 = arith.mulf %468, %467 : vector<2x256xf32>
      %470 = arith.addf %464, %469 : vector<2x256xf32>
      %c15_i32 = arith.constant 15 : i32
      %471 = vector.broadcast %c15_i32 : i32 to vector<2x256xi32>
      %472 = arith.cmpi slt, %28, %471 : vector<2x256xi32>
      %cst_206 = arith.constant 0.000000e+00 : f32
      %473 = vector.broadcast %cst_206 : f32 to vector<2x256xf32>
      %474 = arith.select %472, %470, %473 : vector<2x256xi1>, vector<2x256xf32>
      %475 = arith.addf %385, %474 : vector<2x256xf32>
      %cst_207 = arith.constant 0.000000e+00 : f32
      %476 = vector.broadcast %cst_207 : f32 to vector<2x256xf32>
      %c5 = arith.constant 5 : index
      %477 = memref.load %arg2[%c5] : memref<98xf32, #tpu.memory_space<smem>>
      %c0_208 = arith.constant 0 : index
      %c0_209 = arith.constant 0 : index
      %c82 = arith.constant 82 : index
      %478 = vector.load %arg5[%c0_208, %c0_209, %c82] : memref<2x2x512xf32, #tpu.memory_space<vmem>>, vector<1x2x256xf32>
      %479 = vector.shape_cast %478 : vector<1x2x256xf32> to vector<2x256xf32>
      %480 = vector.broadcast %477 : f32 to vector<2x256xf32>
      %481 = arith.mulf %480, %479 : vector<2x256xf32>
      %482 = arith.addf %476, %481 : vector<2x256xf32>
      %c12 = arith.constant 12 : index
      %483 = memref.load %arg2[%c12] : memref<98xf32, #tpu.memory_space<smem>>
      %c0_210 = arith.constant 0 : index
      %c0_211 = arith.constant 0 : index
      %c98 = arith.constant 98 : index
      %484 = vector.load %arg5[%c0_210, %c0_211, %c98] : memref<2x2x512xf32, #tpu.memory_space<vmem>>, vector<1x2x256xf32>
      %485 = vector.shape_cast %484 : vector<1x2x256xf32> to vector<2x256xf32>
      %486 = vector.broadcast %483 : f32 to vector<2x256xf32>
      %487 = arith.mulf %486, %485 : vector<2x256xf32>
      %488 = arith.addf %482, %487 : vector<2x256xf32>
      %c19 = arith.constant 19 : index
      %489 = memref.load %arg2[%c19] : memref<98xf32, #tpu.memory_space<smem>>
      %c0_212 = arith.constant 0 : index
      %c0_213 = arith.constant 0 : index
      %c114 = arith.constant 114 : index
      %490 = vector.load %arg5[%c0_212, %c0_213, %c114] : memref<2x2x512xf32, #tpu.memory_space<vmem>>, vector<1x2x256xf32>
      %491 = vector.shape_cast %490 : vector<1x2x256xf32> to vector<2x256xf32>
      %492 = vector.broadcast %489 : f32 to vector<2x256xf32>
      %493 = arith.mulf %492, %491 : vector<2x256xf32>
      %494 = arith.addf %488, %493 : vector<2x256xf32>
      %c26 = arith.constant 26 : index
      %495 = memref.load %arg2[%c26] : memref<98xf32, #tpu.memory_space<smem>>
      %c0_214 = arith.constant 0 : index
      %c0_215 = arith.constant 0 : index
      %c130 = arith.constant 130 : index
      %496 = vector.load %arg5[%c0_214, %c0_215, %c130] : memref<2x2x512xf32, #tpu.memory_space<vmem>>, vector<1x2x256xf32>
      %497 = vector.shape_cast %496 : vector<1x2x256xf32> to vector<2x256xf32>
      %498 = vector.broadcast %495 : f32 to vector<2x256xf32>
      %499 = arith.mulf %498, %497 : vector<2x256xf32>
      %500 = arith.addf %494, %499 : vector<2x256xf32>
      %c33 = arith.constant 33 : index
      %501 = memref.load %arg2[%c33] : memref<98xf32, #tpu.memory_space<smem>>
      %c0_216 = arith.constant 0 : index
      %c0_217 = arith.constant 0 : index
      %c146 = arith.constant 146 : index
      %502 = vector.load %arg5[%c0_216, %c0_217, %c146] : memref<2x2x512xf32, #tpu.memory_space<vmem>>, vector<1x2x256xf32>
      %503 = vector.shape_cast %502 : vector<1x2x256xf32> to vector<2x256xf32>
      %504 = vector.broadcast %501 : f32 to vector<2x256xf32>
      %505 = arith.mulf %504, %503 : vector<2x256xf32>
      %506 = arith.addf %500, %505 : vector<2x256xf32>
      %c40 = arith.constant 40 : index
      %507 = memref.load %arg2[%c40] : memref<98xf32, #tpu.memory_space<smem>>
      %c0_218 = arith.constant 0 : index
      %c0_219 = arith.constant 0 : index
      %c162 = arith.constant 162 : index
      %508 = vector.load %arg5[%c0_218, %c0_219, %c162] : memref<2x2x512xf32, #tpu.memory_space<vmem>>, vector<1x2x256xf32>
      %509 = vector.shape_cast %508 : vector<1x2x256xf32> to vector<2x256xf32>
      %510 = vector.broadcast %507 : f32 to vector<2x256xf32>
      %511 = arith.mulf %510, %509 : vector<2x256xf32>
      %512 = arith.addf %506, %511 : vector<2x256xf32>
      %c47 = arith.constant 47 : index
      %513 = memref.load %arg2[%c47] : memref<98xf32, #tpu.memory_space<smem>>
      %c0_220 = arith.constant 0 : index
      %c0_221 = arith.constant 0 : index
      %c178 = arith.constant 178 : index
      %514 = vector.load %arg5[%c0_220, %c0_221, %c178] : memref<2x2x512xf32, #tpu.memory_space<vmem>>, vector<1x2x256xf32>
      %515 = vector.shape_cast %514 : vector<1x2x256xf32> to vector<2x256xf32>
      %516 = vector.broadcast %513 : f32 to vector<2x256xf32>
      %517 = arith.mulf %516, %515 : vector<2x256xf32>
      %518 = arith.addf %512, %517 : vector<2x256xf32>
      %c54 = arith.constant 54 : index
      %519 = memref.load %arg2[%c54] : memref<98xf32, #tpu.memory_space<smem>>
      %c1_222 = arith.constant 1 : index
      %c0_223 = arith.constant 0 : index
      %c82_224 = arith.constant 82 : index
      %520 = vector.load %arg5[%c1_222, %c0_223, %c82_224] : memref<2x2x512xf32, #tpu.memory_space<vmem>>, vector<1x2x256xf32>
      %521 = vector.shape_cast %520 : vector<1x2x256xf32> to vector<2x256xf32>
      %522 = vector.broadcast %519 : f32 to vector<2x256xf32>
      %523 = arith.mulf %522, %521 : vector<2x256xf32>
      %524 = arith.addf %518, %523 : vector<2x256xf32>
      %c61 = arith.constant 61 : index
      %525 = memref.load %arg2[%c61] : memref<98xf32, #tpu.memory_space<smem>>
      %c1_225 = arith.constant 1 : index
      %c0_226 = arith.constant 0 : index
      %c98_227 = arith.constant 98 : index
      %526 = vector.load %arg5[%c1_225, %c0_226, %c98_227] : memref<2x2x512xf32, #tpu.memory_space<vmem>>, vector<1x2x256xf32>
      %527 = vector.shape_cast %526 : vector<1x2x256xf32> to vector<2x256xf32>
      %528 = vector.broadcast %525 : f32 to vector<2x256xf32>
      %529 = arith.mulf %528, %527 : vector<2x256xf32>
      %530 = arith.addf %524, %529 : vector<2x256xf32>
      %c68 = arith.constant 68 : index
      %531 = memref.load %arg2[%c68] : memref<98xf32, #tpu.memory_space<smem>>
      %c1_228 = arith.constant 1 : index
      %c0_229 = arith.constant 0 : index
      %c114_230 = arith.constant 114 : index
      %532 = vector.load %arg5[%c1_228, %c0_229, %c114_230] : memref<2x2x512xf32, #tpu.memory_space<vmem>>, vector<1x2x256xf32>
      %533 = vector.shape_cast %532 : vector<1x2x256xf32> to vector<2x256xf32>
      %534 = vector.broadcast %531 : f32 to vector<2x256xf32>
      %535 = arith.mulf %534, %533 : vector<2x256xf32>
      %536 = arith.addf %530, %535 : vector<2x256xf32>
      %c75 = arith.constant 75 : index
      %537 = memref.load %arg2[%c75] : memref<98xf32, #tpu.memory_space<smem>>
      %c1_231 = arith.constant 1 : index
      %c0_232 = arith.constant 0 : index
      %c130_233 = arith.constant 130 : index
      %538 = vector.load %arg5[%c1_231, %c0_232, %c130_233] : memref<2x2x512xf32, #tpu.memory_space<vmem>>, vector<1x2x256xf32>
      %539 = vector.shape_cast %538 : vector<1x2x256xf32> to vector<2x256xf32>
      %540 = vector.broadcast %537 : f32 to vector<2x256xf32>
      %541 = arith.mulf %540, %539 : vector<2x256xf32>
      %542 = arith.addf %536, %541 : vector<2x256xf32>
      %c82_234 = arith.constant 82 : index
      %543 = memref.load %arg2[%c82_234] : memref<98xf32, #tpu.memory_space<smem>>
      %c1_235 = arith.constant 1 : index
      %c0_236 = arith.constant 0 : index
      %c146_237 = arith.constant 146 : index
      %544 = vector.load %arg5[%c1_235, %c0_236, %c146_237] : memref<2x2x512xf32, #tpu.memory_space<vmem>>, vector<1x2x256xf32>
      %545 = vector.shape_cast %544 : vector<1x2x256xf32> to vector<2x256xf32>
      %546 = vector.broadcast %543 : f32 to vector<2x256xf32>
      %547 = arith.mulf %546, %545 : vector<2x256xf32>
      %548 = arith.addf %542, %547 : vector<2x256xf32>
      %c89 = arith.constant 89 : index
      %549 = memref.load %arg2[%c89] : memref<98xf32, #tpu.memory_space<smem>>
      %c1_238 = arith.constant 1 : index
      %c0_239 = arith.constant 0 : index
      %c162_240 = arith.constant 162 : index
      %550 = vector.load %arg5[%c1_238, %c0_239, %c162_240] : memref<2x2x512xf32, #tpu.memory_space<vmem>>, vector<1x2x256xf32>
      %551 = vector.shape_cast %550 : vector<1x2x256xf32> to vector<2x256xf32>
      %552 = vector.broadcast %549 : f32 to vector<2x256xf32>
      %553 = arith.mulf %552, %551 : vector<2x256xf32>
      %554 = arith.addf %548, %553 : vector<2x256xf32>
      %c96_241 = arith.constant 96 : index
      %555 = memref.load %arg2[%c96_241] : memref<98xf32, #tpu.memory_space<smem>>
      %c1_242 = arith.constant 1 : index
      %c0_243 = arith.constant 0 : index
      %c178_244 = arith.constant 178 : index
      %556 = vector.load %arg5[%c1_242, %c0_243, %c178_244] : memref<2x2x512xf32, #tpu.memory_space<vmem>>, vector<1x2x256xf32>
      %557 = vector.shape_cast %556 : vector<1x2x256xf32> to vector<2x256xf32>
      %558 = vector.broadcast %555 : f32 to vector<2x256xf32>
      %559 = arith.mulf %558, %557 : vector<2x256xf32>
      %560 = arith.addf %554, %559 : vector<2x256xf32>
      %c14_i32 = arith.constant 14 : i32
      %561 = vector.broadcast %c14_i32 : i32 to vector<2x256xi32>
      %562 = arith.cmpi slt, %28, %561 : vector<2x256xi32>
      %cst_245 = arith.constant 0.000000e+00 : f32
      %563 = vector.broadcast %cst_245 : f32 to vector<2x256xf32>
      %564 = arith.select %562, %560, %563 : vector<2x256xi1>, vector<2x256xf32>
      %565 = arith.addf %475, %564 : vector<2x256xf32>
      %cst_246 = arith.constant 0.000000e+00 : f32
      %566 = vector.broadcast %cst_246 : f32 to vector<2x256xf32>
      %c6 = arith.constant 6 : index
      %567 = memref.load %arg2[%c6] : memref<98xf32, #tpu.memory_space<smem>>
      %c0_247 = arith.constant 0 : index
      %c0_248 = arith.constant 0 : index
      %c83 = arith.constant 83 : index
      %568 = vector.load %arg5[%c0_247, %c0_248, %c83] : memref<2x2x512xf32, #tpu.memory_space<vmem>>, vector<1x2x256xf32>
      %569 = vector.shape_cast %568 : vector<1x2x256xf32> to vector<2x256xf32>
      %570 = vector.broadcast %567 : f32 to vector<2x256xf32>
      %571 = arith.mulf %570, %569 : vector<2x256xf32>
      %572 = arith.addf %566, %571 : vector<2x256xf32>
      %c13 = arith.constant 13 : index
      %573 = memref.load %arg2[%c13] : memref<98xf32, #tpu.memory_space<smem>>
      %c0_249 = arith.constant 0 : index
      %c0_250 = arith.constant 0 : index
      %c99 = arith.constant 99 : index
      %574 = vector.load %arg5[%c0_249, %c0_250, %c99] : memref<2x2x512xf32, #tpu.memory_space<vmem>>, vector<1x2x256xf32>
      %575 = vector.shape_cast %574 : vector<1x2x256xf32> to vector<2x256xf32>
      %576 = vector.broadcast %573 : f32 to vector<2x256xf32>
      %577 = arith.mulf %576, %575 : vector<2x256xf32>
      %578 = arith.addf %572, %577 : vector<2x256xf32>
      %c20 = arith.constant 20 : index
      %579 = memref.load %arg2[%c20] : memref<98xf32, #tpu.memory_space<smem>>
      %c0_251 = arith.constant 0 : index
      %c0_252 = arith.constant 0 : index
      %c115 = arith.constant 115 : index
      %580 = vector.load %arg5[%c0_251, %c0_252, %c115] : memref<2x2x512xf32, #tpu.memory_space<vmem>>, vector<1x2x256xf32>
      %581 = vector.shape_cast %580 : vector<1x2x256xf32> to vector<2x256xf32>
      %582 = vector.broadcast %579 : f32 to vector<2x256xf32>
      %583 = arith.mulf %582, %581 : vector<2x256xf32>
      %584 = arith.addf %578, %583 : vector<2x256xf32>
      %c27 = arith.constant 27 : index
      %585 = memref.load %arg2[%c27] : memref<98xf32, #tpu.memory_space<smem>>
      %c0_253 = arith.constant 0 : index
      %c0_254 = arith.constant 0 : index
      %c131 = arith.constant 131 : index
      %586 = vector.load %arg5[%c0_253, %c0_254, %c131] : memref<2x2x512xf32, #tpu.memory_space<vmem>>, vector<1x2x256xf32>
      %587 = vector.shape_cast %586 : vector<1x2x256xf32> to vector<2x256xf32>
      %588 = vector.broadcast %585 : f32 to vector<2x256xf32>
      %589 = arith.mulf %588, %587 : vector<2x256xf32>
      %590 = arith.addf %584, %589 : vector<2x256xf32>
      %c34 = arith.constant 34 : index
      %591 = memref.load %arg2[%c34] : memref<98xf32, #tpu.memory_space<smem>>
      %c0_255 = arith.constant 0 : index
      %c0_256 = arith.constant 0 : index
      %c147 = arith.constant 147 : index
      %592 = vector.load %arg5[%c0_255, %c0_256, %c147] : memref<2x2x512xf32, #tpu.memory_space<vmem>>, vector<1x2x256xf32>
      %593 = vector.shape_cast %592 : vector<1x2x256xf32> to vector<2x256xf32>
      %594 = vector.broadcast %591 : f32 to vector<2x256xf32>
      %595 = arith.mulf %594, %593 : vector<2x256xf32>
      %596 = arith.addf %590, %595 : vector<2x256xf32>
      %c41 = arith.constant 41 : index
      %597 = memref.load %arg2[%c41] : memref<98xf32, #tpu.memory_space<smem>>
      %c0_257 = arith.constant 0 : index
      %c0_258 = arith.constant 0 : index
      %c163 = arith.constant 163 : index
      %598 = vector.load %arg5[%c0_257, %c0_258, %c163] : memref<2x2x512xf32, #tpu.memory_space<vmem>>, vector<1x2x256xf32>
      %599 = vector.shape_cast %598 : vector<1x2x256xf32> to vector<2x256xf32>
      %600 = vector.broadcast %597 : f32 to vector<2x256xf32>
      %601 = arith.mulf %600, %599 : vector<2x256xf32>
      %602 = arith.addf %596, %601 : vector<2x256xf32>
      %c48 = arith.constant 48 : index
      %603 = memref.load %arg2[%c48] : memref<98xf32, #tpu.memory_space<smem>>
      %c0_259 = arith.constant 0 : index
      %c0_260 = arith.constant 0 : index
      %c179 = arith.constant 179 : index
      %604 = vector.load %arg5[%c0_259, %c0_260, %c179] : memref<2x2x512xf32, #tpu.memory_space<vmem>>, vector<1x2x256xf32>
      %605 = vector.shape_cast %604 : vector<1x2x256xf32> to vector<2x256xf32>
      %606 = vector.broadcast %603 : f32 to vector<2x256xf32>
      %607 = arith.mulf %606, %605 : vector<2x256xf32>
      %608 = arith.addf %602, %607 : vector<2x256xf32>
      %c55 = arith.constant 55 : index
      %609 = memref.load %arg2[%c55] : memref<98xf32, #tpu.memory_space<smem>>
      %c1_261 = arith.constant 1 : index
      %c0_262 = arith.constant 0 : index
      %c83_263 = arith.constant 83 : index
      %610 = vector.load %arg5[%c1_261, %c0_262, %c83_263] : memref<2x2x512xf32, #tpu.memory_space<vmem>>, vector<1x2x256xf32>
      %611 = vector.shape_cast %610 : vector<1x2x256xf32> to vector<2x256xf32>
      %612 = vector.broadcast %609 : f32 to vector<2x256xf32>
      %613 = arith.mulf %612, %611 : vector<2x256xf32>
      %614 = arith.addf %608, %613 : vector<2x256xf32>
      %c62 = arith.constant 62 : index
      %615 = memref.load %arg2[%c62] : memref<98xf32, #tpu.memory_space<smem>>
      %c1_264 = arith.constant 1 : index
      %c0_265 = arith.constant 0 : index
      %c99_266 = arith.constant 99 : index
      %616 = vector.load %arg5[%c1_264, %c0_265, %c99_266] : memref<2x2x512xf32, #tpu.memory_space<vmem>>, vector<1x2x256xf32>
      %617 = vector.shape_cast %616 : vector<1x2x256xf32> to vector<2x256xf32>
      %618 = vector.broadcast %615 : f32 to vector<2x256xf32>
      %619 = arith.mulf %618, %617 : vector<2x256xf32>
      %620 = arith.addf %614, %619 : vector<2x256xf32>
      %c69 = arith.constant 69 : index
      %621 = memref.load %arg2[%c69] : memref<98xf32, #tpu.memory_space<smem>>
      %c1_267 = arith.constant 1 : index
      %c0_268 = arith.constant 0 : index
      %c115_269 = arith.constant 115 : index
      %622 = vector.load %arg5[%c1_267, %c0_268, %c115_269] : memref<2x2x512xf32, #tpu.memory_space<vmem>>, vector<1x2x256xf32>
      %623 = vector.shape_cast %622 : vector<1x2x256xf32> to vector<2x256xf32>
      %624 = vector.broadcast %621 : f32 to vector<2x256xf32>
      %625 = arith.mulf %624, %623 : vector<2x256xf32>
      %626 = arith.addf %620, %625 : vector<2x256xf32>
      %c76 = arith.constant 76 : index
      %627 = memref.load %arg2[%c76] : memref<98xf32, #tpu.memory_space<smem>>
      %c1_270 = arith.constant 1 : index
      %c0_271 = arith.constant 0 : index
      %c131_272 = arith.constant 131 : index
      %628 = vector.load %arg5[%c1_270, %c0_271, %c131_272] : memref<2x2x512xf32, #tpu.memory_space<vmem>>, vector<1x2x256xf32>
      %629 = vector.shape_cast %628 : vector<1x2x256xf32> to vector<2x256xf32>
      %630 = vector.broadcast %627 : f32 to vector<2x256xf32>
      %631 = arith.mulf %630, %629 : vector<2x256xf32>
      %632 = arith.addf %626, %631 : vector<2x256xf32>
      %c83_273 = arith.constant 83 : index
      %633 = memref.load %arg2[%c83_273] : memref<98xf32, #tpu.memory_space<smem>>
      %c1_274 = arith.constant 1 : index
      %c0_275 = arith.constant 0 : index
      %c147_276 = arith.constant 147 : index
      %634 = vector.load %arg5[%c1_274, %c0_275, %c147_276] : memref<2x2x512xf32, #tpu.memory_space<vmem>>, vector<1x2x256xf32>
      %635 = vector.shape_cast %634 : vector<1x2x256xf32> to vector<2x256xf32>
      %636 = vector.broadcast %633 : f32 to vector<2x256xf32>
      %637 = arith.mulf %636, %635 : vector<2x256xf32>
      %638 = arith.addf %632, %637 : vector<2x256xf32>
      %c90 = arith.constant 90 : index
      %639 = memref.load %arg2[%c90] : memref<98xf32, #tpu.memory_space<smem>>
      %c1_277 = arith.constant 1 : index
      %c0_278 = arith.constant 0 : index
      %c163_279 = arith.constant 163 : index
      %640 = vector.load %arg5[%c1_277, %c0_278, %c163_279] : memref<2x2x512xf32, #tpu.memory_space<vmem>>, vector<1x2x256xf32>
      %641 = vector.shape_cast %640 : vector<1x2x256xf32> to vector<2x256xf32>
      %642 = vector.broadcast %639 : f32 to vector<2x256xf32>
      %643 = arith.mulf %642, %641 : vector<2x256xf32>
      %644 = arith.addf %638, %643 : vector<2x256xf32>
      %c97_280 = arith.constant 97 : index
      %645 = memref.load %arg2[%c97_280] : memref<98xf32, #tpu.memory_space<smem>>
      %c1_281 = arith.constant 1 : index
      %c0_282 = arith.constant 0 : index
      %c179_283 = arith.constant 179 : index
      %646 = vector.load %arg5[%c1_281, %c0_282, %c179_283] : memref<2x2x512xf32, #tpu.memory_space<vmem>>, vector<1x2x256xf32>
      %647 = vector.shape_cast %646 : vector<1x2x256xf32> to vector<2x256xf32>
      %648 = vector.broadcast %645 : f32 to vector<2x256xf32>
      %649 = arith.mulf %648, %647 : vector<2x256xf32>
      %650 = arith.addf %644, %649 : vector<2x256xf32>
      %c13_i32 = arith.constant 13 : i32
      %651 = vector.broadcast %c13_i32 : i32 to vector<2x256xi32>
      %652 = arith.cmpi slt, %28, %651 : vector<2x256xi32>
      %cst_284 = arith.constant 0.000000e+00 : f32
      %653 = vector.broadcast %cst_284 : f32 to vector<2x256xf32>
      %654 = arith.select %652, %650, %653 : vector<2x256xi1>, vector<2x256xf32>
      %655 = arith.addf %565, %654 : vector<2x256xf32>
      %656 = arith.negf %655 : vector<2x256xf32>
      %657 = math.exp %656 : vector<2x256xf32>
      %cst_285 = arith.constant 1.000000e+00 : f32
      %658 = vector.broadcast %cst_285 : f32 to vector<2x256xf32>
      %659 = arith.addf %658, %657 : vector<2x256xf32>
      %660 = arith.divf %658, %659 : vector<2x256xf32>
      %c0_286 = arith.constant 0 : index
      %c0_287 = arith.constant 0 : index
      %c0_288 = arith.constant 0 : index
      %661 = vector.load %arg4[%c0_286, %c0_287, %c0_288] : memref<2x1x256xf32, #tpu.memory_space<vmem>>, vector<2x1x256xf32>
      %662 = vector.shape_cast %661 : vector<2x1x256xf32> to vector<2x256xf32>
      %663 = vector.shape_cast %660 : vector<2x256xf32> to vector<2x1x256xf32>
      tpu.vector_store %arg4[%c0_286, %c0_287, %c0_288], %663 {strides = array<i32>} : memref<2x1x256xf32, #tpu.memory_space<vmem>>, vector<2x1x256xf32>,
    } else {
    }
    return
  }
  func.func @transform_0(%arg0: i32, %arg1: i32) -> i32 {
    %c0_i32 = arith.constant 0 : i32
    %c0_i32_0 = arith.constant 0 : i32
    return %c0_i32 : i32
  }
  func.func @transform_1(%arg0: i32, %arg1: i32) -> (i32, i32, i32) {
    %c0_i32 = arith.constant 0 : i32
    %c0_i32_0 = arith.constant 0 : i32
    return %arg0, %arg1, %c0_i32 : i32, i32, i32
  }
  func.func @transform_2(%arg0: i32, %arg1: i32) -> (i32, i32, i32) {
    %c0_i32 = arith.constant 0 : i32
    %c0_i32_0 = arith.constant 0 : i32
    %c0_i32_1 = arith.constant 0 : i32
    return %arg0, %c0_i32, %c0_i32_0 : i32, i32, i32
  }
}

</mosaic_0001>

<llo_original>
// kernel: tpu_custom_call.1
$region0: #{tpu_custom_call.1}
  #allocation0 [shape = 'u32[]', space=smem, size = 0x4, offset = 0x4, fixed_abs, tag = 'smem constant byte address 0x4 - core index']
  #allocation1 [shape = 'u32[72,128]{1,0:T(1,128)}', space=vmem, size = 0x9000, scoped, tag = 'internal scratch']
  #allocation2 [shape = 'f32[2,2,512]{2,1,0:T(2,128)}', space=vmem, size = 0x2000, scoped, tag = 'scratch operand']
  %s0 = inlined_call_operand.hbm [shape: f32[98], index: 0, kind: input, shape index: {}]
  %s1 = inlined_call_operand.hbm [shape: f32[2,4,256], index: 1, kind: input, shape index: {}]
  %s2 = inlined_call_operand.hbm [shape: f32[2,1,256], index: 2, kind: output, shape index: {}]
  %s3 = sld [smem:[#allocation0]]
  $region38: #{tpu_custom_call.1} parent=0
    _
  %s5 = ssub.s32 1, %s3
  %s6 = scalar_select 0, %s5, %s3
  $region1: #{tpu_custom_call.1} parent=0
    #allocation3 [shape = 'u8[512]{0}', space=smem, size = 0x200, scoped, tag = 'input window, operand 0, single buffered']
    #allocation4 [shape = 's32[1]{0}', space=sflag, size = 0x4, scoped, tag = 'scoped memory for tpu_custom_call.1']
    #allocation5 [shape = 's32[1]{0}', space=sflag, size = 0x4, scoped, tag = 'scoped memory for tpu_custom_call.1']
    #allocation6 [shape = 's32[1]{0}', space=sflag, size = 0x4, scoped, tag = 'scoped memory for tpu_custom_call.1']
    #allocation7 [shape = 'u8[8192]{0}', space=vmem, size = 0x2000, scoped, tag = 'input window, operand 1, single buffered']
    #allocation8 [shape = 'u8[2048]{0}', space=vmem, size = 0x800, scoped, tag = 'output window, operand 0, single buffered']
    %7 = vsyncpa [#allocation6], 0
    %8 = vsyncpa [#allocation4], 0
    %9 = vsyncpa [#allocation5], 0
    // Predicated region
    $region2: #{tpu_custom_call.1} parent=1 // pred_check
      _
    $region3: #{tpu_custom_call.1} parent=1 // pred_check_branch
      %11 = sbr.rel (0) target = $region5
    $region4: #{tpu_custom_call.1} parent=1 // pred_region
      %13 = vsyncadd [#allocation6], 0
      %s15 = sshll.u32 %s0, 4
      %s16 = int_to_ptr.hbm [resolvable:$true] %s15
      %18 = dma.hbm_to_smem %s16, 16, [#allocation3], [#allocation6]
    $region5: #{tpu_custom_call.1} parent=1 // pred_fallthru
      _
    // Predicated region
    $region6: #{tpu_custom_call.1} parent=1 // pred_check
      _
    $region7: #{tpu_custom_call.1} parent=1 // pred_check_branch
      %20 = sbr.rel (0) target = $region9
    $region8: #{tpu_custom_call.1} parent=1 // pred_region
      %22 = vsyncadd [#allocation4], 0
      %s23 = sshll.u32 %s1, 4
      %s24 = int_to_ptr.hbm [resolvable:$true] %s23
      %s25 = sshll.u32 [#allocation7], 4
      %s26 = int_to_ptr.vmem [resolvable:$true] %s25
      %31 = dma.hbm_to_vmem [thread:$0]  %s24, 256, %s26, [#allocation4], 128, 128, 8
    $region9: #{tpu_custom_call.1} parent=1 // pred_fallthru
      _
    // Predicated region
    $region10: #{tpu_custom_call.1} parent=1 // pred_check
      _
    $region11: #{tpu_custom_call.1} parent=1 // pred_check_branch
      %33 = sbr.rel (0) target = $region13
    $region12: #{tpu_custom_call.1} parent=1 // pred_region
      %35 = dma.done [#allocation6], 16
    $region13: #{tpu_custom_call.1} parent=1 // pred_fallthru
      _
    // Predicated region
    $region14: #{tpu_custom_call.1} parent=1 // pred_check
      _
    $region15: #{tpu_custom_call.1} parent=1 // pred_check_branch
      %37 = sbr.rel (0) target = $region17
    $region16: #{tpu_custom_call.1} parent=1 // pred_region
      %39 = dma.done [#allocation4], 256
    $region17: #{tpu_custom_call.1} parent=1 // pred_fallthru
      _
    %40 = sfence
    %v41 = vld [vmem:[#allocation7] sm:$0xff]
    %v42 = vld [vmem:[#allocation7 + $0x8] sm:$0xff]
    %45 = vst [vmem:[#allocation1] ss:$2 sm:$0xff] %v41
    %v46 = vld.sshfl [vmem:[#allocation1] sm:$0xff pattern:$0x75316420]
    %v47 = vld.sshfl [vmem:[#allocation1 + $0x8] sm:$0xff pattern:$0x75316420]
    %s48 = scalar_lea.vmem [#allocation1], 16
    %49 = vst [vmem:[%s48] ss:$2 sm:$0xff] %v42
    %v50 = vld.sshfl [vmem:[#allocation1 + $0x10] sm:$0xff pattern:$0x75316420]
    %v51 = vld.sshfl [vmem:[#allocation1 + $0x18] sm:$0xff pattern:$0x75316420]
    %vm56 = vcmask 1043456
    %v57 = vsel %vm56, %v46, 0.0
    %v58 = vrot.slane %v57, 4
    %v59 = vadd.f32 %v57, %v58
    %v60 = vrot.slane %v59, 2
    %v61 = vadd.f32 %v59, %v60
    %v62 = vrot.slane %v61, 1
    %v63 = vadd.f32 %v61, %v62
    %v64 = vsel %vm56, %v47, 0.0
    %v65 = vrot.slane %v64, 4
    %v66 = vadd.f32 %v64, %v65
    %v67 = vrot.slane %v66, 2
    %v68 = vadd.f32 %v66, %v67
    %v69 = vrot.slane %v68, 1
    %v70 = vadd.f32 %v68, %v69
    %v71 = vsel %vm56, %v50, 0.0
    %v72 = vrot.slane %v71, 4
    %v73 = vadd.f32 %v71, %v72
    %v74 = vrot.slane %v73, 2
    %v75 = vadd.f32 %v73, %v74
    %v76 = vrot.slane %v75, 1
    %v77 = vadd.f32 %v75, %v76
    %v78 = vsel %vm56, %v51, 0.0
    %v79 = vrot.slane %v78, 4
    %v80 = vadd.f32 %v78, %v79
    %v81 = vrot.slane %v80, 2
    %v82 = vadd.f32 %v80, %v81
    %v83 = vrot.slane %v82, 1
    %v84 = vadd.f32 %v82, %v83
    %85 = vst [vmem:[#allocation1] ss:$2 sm:$0xff] %v41
    %v86 = vld.sshfl [vmem:[#allocation1] sm:$0xff pattern:$0x75316420]
    %v87 = vld.sshfl [vmem:[#allocation1 + $0x8] sm:$0xff pattern:$0x75316420]
    %s88 = scalar_lea.vmem [#allocation1], 16
    %89 = vst [vmem:[%s88] ss:$2 sm:$0xff] %v42
    %v90 = vld.sshfl [vmem:[#allocation1 + $0x10] sm:$0xff pattern:$0x75316420]
    %v91 = vld.sshfl [vmem:[#allocation1 + $0x18] sm:$0xff pattern:$0x75316420]
    %v96 = vsel %vm56, %v86, -inf
    %v97 = vrot.slane %v96, 4
    %v98 = vmax.f32 %v96, %v97
    %v99 = vrot.slane %v98, 2
    %v100 = vmax.f32 %v98, %v99
    %v101 = vrot.slane %v100, 1
    %v102 = vmax.f32 %v100, %v101
    %v103 = vsel %vm56, %v87, -inf
    %v104 = vrot.slane %v103, 4
    %v105 = vmax.f32 %v103, %v104
    %v106 = vrot.slane %v105, 2
    %v107 = vmax.f32 %v105, %v106
    %v108 = vrot.slane %v107, 1
    %v109 = vmax.f32 %v107, %v108
    %v110 = vsel %vm56, %v90, -inf
    %v111 = vrot.slane %v110, 4
    %v112 = vmax.f32 %v110, %v111
    %v113 = vrot.slane %v112, 2
    %v114 = vmax.f32 %v112, %v113
    %v115 = vrot.slane %v114, 1
    %v116 = vmax.f32 %v114, %v115
    %v117 = vsel %vm56, %v91, -inf
    %v118 = vrot.slane %v117, 4
    %v119 = vmax.f32 %v117, %v118
    %v120 = vrot.slane %v119, 2
    %v121 = vmax.f32 %v119, %v120
    %v122 = vrot.slane %v121, 1
    %v123 = vmax.f32 %v121, %v122
    %p124 = scmp.eq.s32.totalorder 0, 0
    // Predicated region
    $region18: #{tpu_custom_call.1} parent=1 // pred_check
      %p125 = pneg %p124
    $region19: #{tpu_custom_call.1} parent=1 // pred_check_branch
      %127 = sbr.rel (%p125) target = $region21
    $region20: #{tpu_custom_call.1} parent=1 // pred_region
      %128 = vst [vmem:[#allocation2] sm:$0xff] 0.0
      %129 = vst [vmem:[#allocation2 + $0x8] sm:$0xff] 0.0
      %v134 = vrot.slane %v70, 6
      %v135 = vrot.slane %v84, 6
      %vm136 = vcmask 1041408
      %v137 = vsel %vm136, %v63, %v134
      %v138 = vsel %vm136, %v77, %v135
      %vm139 = vcmask 1044484
      %v140 = vsel %vm139, %v137, %v137
      %vm141 = vcmask 1046534
      %v142 = vsel %vm141, %v137, %v140
      %v143 = vrot.slane %v138, 7
      %vm144 = vcmask 1041409
      %v145 = vsel %vm144, %v143, %v142
      %vm146 = vcmask 1043459
      %v147 = vsel %vm146, %v143, %v145
      %vm148 = vcmask 1045509
      %v149 = vsel %vm148, %v143, %v147
      %vm150 = vcmask 1047559
      %v151 = vsel %vm150, %v143, %v149
      %153 = vst [vmem:[#allocation2 + $0x2] sm:$0xf] %v151
      %v158 = vrot.slane %v109, 6
      %v159 = vrot.slane %v123, 6
      %v160 = vsel %vm136, %v102, %v158
      %v161 = vsel %vm136, %v116, %v159
      %v162 = vsel %vm139, %v160, %v160
      %v163 = vsel %vm141, %v160, %v162
      %v164 = vrot.slane %v161, 7
      %v165 = vsel %vm144, %v164, %v163
      %v166 = vsel %vm146, %v164, %v165
      %v167 = vsel %vm148, %v164, %v166
      %v168 = vsel %vm150, %v164, %v167
      %s170 = scalar_lea.vmem [#allocation2], 8
      %171 = vst [vmem:[%s170 + $0x2] sm:$0xf] %v168
    $region21: #{tpu_custom_call.1} parent=1 // pred_fallthru
      _
    %p172 = scmp.gt.s32.totalorder 0, 0
    // Predicated region
    $region22: #{tpu_custom_call.1} parent=1 // pred_check
      %p173 = pneg %p172
    $region23: #{tpu_custom_call.1} parent=1 // pred_check_branch
      %175 = sbr.rel (%p173) target = $region25
    $region24: #{tpu_custom_call.1} parent=1 // pred_region
      %v176 = vld [vmem:[#allocation2 + $0x2] sm:$0xf]
      %v181 = vrot.slane %v70, 6
      %v182 = vrot.slane %v84, 6
      %vm183 = vcmask 1041408
      %v184 = vsel %vm183, %v63, %v181
      %v185 = vsel %vm183, %v77, %v182
      %vm186 = vcmask 1044484
      %v187 = vsel %vm186, %v184, %v184
      %vm188 = vcmask 1046534
      %v189 = vsel %vm188, %v184, %v187
      %v190 = vrot.slane %v185, 7
      %vm191 = vcmask 1041409
      %v192 = vsel %vm191, %v190, %v189
      %vm193 = vcmask 1043459
      %v194 = vsel %vm193, %v190, %v192
      %vm195 = vcmask 1045509
      %v196 = vsel %vm195, %v190, %v194
      %vm197 = vcmask 1047559
      %v198 = vsel %vm197, %v190, %v196
      %v200 = vadd.f32 %v176, %v198
      %201 = vst [vmem:[#allocation2 + $0x2] sm:$0xf] %v200
      %s202 = scalar_lea.vmem [#allocation2], 8
      %v203 = vld [vmem:[%s202 + $0x2] sm:$0xf]
      %v208 = vrot.slane %v109, 6
      %v209 = vrot.slane %v123, 6
      %v210 = vsel %vm183, %v102, %v208
      %v211 = vsel %vm183, %v116, %v209
      %v212 = vsel %vm186, %v210, %v210
      %v213 = vsel %vm188, %v210, %v212
      %v214 = vrot.slane %v211, 7
      %v215 = vsel %vm191, %v214, %v213
      %v216 = vsel %vm193, %v214, %v215
      %v217 = vsel %vm195, %v214, %v216
      %v218 = vsel %vm197, %v214, %v217
      %v220 = vmax.f32 %v203, %v218
      %221 = vst [vmem:[%s202 + $0x2] sm:$0xf] %v220
    $region25: #{tpu_custom_call.1} parent=1 // pred_fallthru
      _
    // Predicated region
    $region26: #{tpu_custom_call.1} parent=1 // pred_check
      %p222 = pneg %p124
    $region27: #{tpu_custom_call.1} parent=1 // pred_check_branch
      %224 = sbr.rel (%p222) target = $region29
    $region28: #{tpu_custom_call.1} parent=1 // pred_region
      %v225 = vlaneseq
      %v226 = vand.u32 %v225, 127
      %v227 = vadd.s32 %v226, 128
      %vm228 = vcmp.lt.s32.totalorder %v226, 0
      %v229 = vsub.s32 0, %v226
      %v230 = vsel %vm228, %v229, %v226
      %v231 = vshrl.u32 %v230, 4
      %v232 = vand.u32 %v230, 15
      %v233 = vsub.s32 0, %v232
      %v234 = vsel %vm228, %v233, %v232
      %vm235 = vcmp.lt.s32.totalorder %v227, 0
      %v236 = vsub.s32 0, %v227
      %v237 = vsel %vm235, %v236, %v227
      %v238 = vshrl.u32 %v237, 4
      %v239 = vand.u32 %v237, 15
      %v240 = vsub.s32 0, %v239
      %v241 = vsel %vm235, %v240, %v239
      %vm242 = vcmp.ne.s32.totalorder %v234, 0
      %vm243 = vcmp.ne.s32.totalorder %v241, 0
      %vm244 = vcmp.lt.s32.totalorder %v234, 0
      %vm245 = vcmp.lt.s32.totalorder %v241, 0
      %vm246 = vmand %vm244, %vm242
      %vm247 = vmand %vm245, %vm243
      %v248 = vadd.s32 %v234, 16
      %v249 = vadd.s32 %v241, 16
      %v250 = vsel %vm246, %v248, %v234
      %v251 = vsel %vm247, %v249, %v241
      %s252 = sld [smem:[#allocation3]]
      %v253 = vld [vmem:[#allocation2] sm:$0x3f]
      %v254 = vstv %s252
      %v255 = vmul.f32 %v254, %v253
      %v256 = vadd.f32 %v255, 0.0
      %s257 = sld [smem:[#allocation3 + $0x7]]
      %v258 = vstv %s257
      %v259 = vmul.f32 %v258, %v253
      %261 = vrot.lane.b32.xlu0 %v259, 112
      %v262 = vpop.permute.xlu0 %261
      %v263 = vrot.slane %v262, 2
      %vm264 = vcmask 916480
      %v265 = vsel %vm264, %v262, %v263
      %v267 = vadd.f32 %v256, %v265
      %s268 = sld [smem:[#allocation3 + $0xe]]
      %v269 = vstv %s268
      %v270 = vmul.f32 %v269, %v253
      %272 = vrot.lane.b32.xlu0 %v270, 96
      %v273 = vpop.permute.xlu0 %272
      %v274 = vrot.slane %v273, 2
      %vm275 = vcmask 785408
      %v276 = vsel %vm275, %v273, %v274
      %v278 = vadd.f32 %v267, %v276
      %s279 = sld [smem:[#allocation3 + $0x15]]
      %v280 = vstv %s279
      %v281 = vmul.f32 %v280, %v253
      %283 = vrot.lane.b32.xlu0 %v281, 80
      %v284 = vpop.permute.xlu0 %283
      %v285 = vrot.slane %v284, 2
      %vm286 = vcmask 654336
      %v287 = vsel %vm286, %v284, %v285
      %v289 = vadd.f32 %v278, %v287
      %s290 = sld [smem:[#allocation3 + $0x1c]]
      %v291 = vld [vmem:[#allocation2 + $0x2] sm:$0x3f]
      %v292 = vstv %s290
      %v293 = vmul.f32 %v292, %v291
      %295 = vrot.lane.b32.xlu0 %v293, 64
      %v296 = vpop.permute.xlu0 %295
      %v297 = vrot.slane %v296, 6
      %vm298 = vcmask 523264
      %v299 = vsel %vm298, %v297, %v296
      %v301 = vadd.f32 %v289, %v299
      %s302 = sld [smem:[#allocation3 + $0x23]]
      %v303 = vstv %s302
      %v304 = vmul.f32 %v303, %v291
      %306 = vrot.lane.b32.xlu0 %v304, 48
      %v307 = vpop.permute.xlu0 %306
      %v308 = vrot.slane %v307, 6
      %vm309 = vcmask 392192
      %v310 = vsel %vm309, %v308, %v307
      %v312 = vadd.f32 %v301, %v310
      %s313 = sld [smem:[#allocation3 + $0x2a]]
      %v314 = vstv %s313
      %v315 = vmul.f32 %v314, %v291
      %317 = vrot.lane.b32.xlu0 %v315, 32
      %v318 = vpop.permute.xlu0 %317
      %v319 = vrot.slane %v318, 6
      %vm320 = vcmask 261120
      %v321 = vsel %vm320, %v319, %v318
      %v323 = vadd.f32 %v312, %v321
      %s324 = sld [smem:[#allocation3 + $0x31]]
      %s325 = scalar_lea.vmem [#allocation2], 8
      %v326 = vld [vmem:[%s325] sm:$0x3f]
      %v327 = vstv %s324
      %v328 = vmul.f32 %v327, %v326
      %v329 = vadd.f32 %v323, %v328
      %s330 = sld [smem:[#allocation3 + $0x38]]
      %v331 = vstv %s330
      %v332 = vmul.f32 %v331, %v326
      %334 = vrot.lane.b32.xlu0 %v332, 112
      %v335 = vpop.permute.xlu0 %334
      %v336 = vrot.slane %v335, 2
      %v337 = vsel %vm264, %v335, %v336
      %v339 = vadd.f32 %v329, %v337
      %s340 = sld [smem:[#allocation3 + $0x3f]]
      %v341 = vstv %s340
      %v342 = vmul.f32 %v341, %v326
      %344 = vrot.lane.b32.xlu0 %v342, 96
      %v345 = vpop.permute.xlu0 %344
      %v346 = vrot.slane %v345, 2
      %v347 = vsel %vm275, %v345, %v346
      %v349 = vadd.f32 %v339, %v347
      %s350 = sld [smem:[#allocation3 + $0x46]]
      %v351 = vstv %s350
      %v352 = vmul.f32 %v351, %v326
      %354 = vrot.lane.b32.xlu0 %v352, 80
      %v355 = vpop.permute.xlu0 %354
      %v356 = vrot.slane %v355, 2
      %v357 = vsel %vm286, %v355, %v356
      %v359 = vadd.f32 %v349, %v357
      %s360 = sld [smem:[#allocation3 + $0x4d]]
      %v361 = vld [vmem:[%s325 + $0x2] sm:$0x3f]
      %v362 = vstv %s360
      %v363 = vmul.f32 %v362, %v361
      %365 = vrot.lane.b32.xlu0 %v363, 64
      %v366 = vpop.permute.xlu0 %365
      %v367 = vrot.slane %v366, 6
      %v368 = vsel %vm298, %v367, %v366
      %v370 = vadd.f32 %v359, %v368
      %s371 = sld [smem:[#allocation3 + $0x54]]
      %v372 = vstv %s371
      %v373 = vmul.f32 %v372, %v361
      %375 = vrot.lane.b32.xlu0 %v373, 48
      %v376 = vpop.permute.xlu0 %375
      %v377 = vrot.slane %v376, 6
      %v378 = vsel %vm309, %v377, %v376
      %v380 = vadd.f32 %v370, %v378
      %s381 = sld [smem:[#allocation3 + $0x5b]]
      %v382 = vstv %s381
      %v383 = vmul.f32 %v382, %v361
      %385 = vrot.lane.b32.xlu0 %v383, 32
      %v386 = vpop.permute.xlu0 %385
      %v387 = vrot.slane %v386, 6
      %v388 = vsel %vm320, %v387, %v386
      %v390 = vadd.f32 %v380, %v388
      %vm391 = vcmp.ge.s32.totalorder %v250, 3
      %vm392 = vcmp.ge.s32.totalorder %v251, 3
      %394 = vst [vmem:[#allocation1] ss:$4 sm:$0xff] %v390
      %v395 = vld.sshfl [vmem:[#allocation1] sm:$0xff pattern:$0x73625140]
      %v396 = vld.sshfl [vmem:[#allocation1 + $0x8] sm:$0xff pattern:$0x73625140]
      %v397 = vld.sshfl [vmem:[#allocation1 + $0x10] sm:$0xff pattern:$0x73625140]
      %398 = vrot.lane.b32.xlu0 %v395, 51
      %v399 = vpop.permute.xlu0 %398
      %400 = vrot.lane.b32.xlu0 %v396, 51
      %v401 = vpop.permute.xlu0 %400
      %402 = vrot.lane.b32.xlu0 %v397, 51
      %v403 = vpop.permute.xlu0 %402
      %vm404 = vcmask 416768
      %v405 = vsel %vm404, %v399, %v401
      %v406 = vsel %vm404, %v401, %v403
      %v409 = vsel %vm391, %v405, 0.0
      %v410 = vsel %vm392, %v406, 0.0
      %v411 = vadd.f32 %v409, 0.0
      %v412 = vadd.f32 %v410, 0.0
      %s413 = sld [smem:[#allocation3 + $0x1]]
      %v414 = vld [vmem:[#allocation2] sm:$0x3f]
      %v415 = vstv %s413
      %v416 = vmul.f32 %v415, %v414
      %v417 = vadd.f32 %v416, 0.0
      %s418 = sld [smem:[#allocation3 + $0x8]]
      %v419 = vstv %s418
      %v420 = vmul.f32 %v419, %v414
      %422 = vrot.lane.b32.xlu0 %v420, 112
      %v423 = vpop.permute.xlu0 %422
      %v424 = vrot.slane %v423, 2
      %v425 = vsel %vm264, %v423, %v424
      %v427 = vadd.f32 %v417, %v425
      %s428 = sld [smem:[#allocation3 + $0xf]]
      %v429 = vstv %s428
      %v430 = vmul.f32 %v429, %v414
      %432 = vrot.lane.b32.xlu0 %v430, 96
      %v433 = vpop.permute.xlu0 %432
      %v434 = vrot.slane %v433, 2
      %v435 = vsel %vm275, %v433, %v434
      %v437 = vadd.f32 %v427, %v435
      %s438 = sld [smem:[#allocation3 + $0x16]]
      %v439 = vstv %s438
      %v440 = vmul.f32 %v439, %v414
      %442 = vrot.lane.b32.xlu0 %v440, 80
      %v443 = vpop.permute.xlu0 %442
      %v444 = vrot.slane %v443, 2
      %v445 = vsel %vm286, %v443, %v444
      %v447 = vadd.f32 %v437, %v445
      %s448 = sld [smem:[#allocation3 + $0x1d]]
      %v449 = vld [vmem:[#allocation2 + $0x2] sm:$0x3f]
      %v450 = vstv %s448
      %v451 = vmul.f32 %v450, %v449
      %453 = vrot.lane.b32.xlu0 %v451, 64
      %v454 = vpop.permute.xlu0 %453
      %v455 = vrot.slane %v454, 6
      %v456 = vsel %vm298, %v455, %v454
      %v458 = vadd.f32 %v447, %v456
      %s459 = sld [smem:[#allocation3 + $0x24]]
      %v460 = vstv %s459
      %v461 = vmul.f32 %v460, %v449
      %463 = vrot.lane.b32.xlu0 %v461, 48
      %v464 = vpop.permute.xlu0 %463
      %v465 = vrot.slane %v464, 6
      %v466 = vsel %vm309, %v465, %v464
      %v468 = vadd.f32 %v458, %v466
      %s469 = sld [smem:[#allocation3 + $0x2b]]
      %v470 = vstv %s469
      %v471 = vmul.f32 %v470, %v449
      %473 = vrot.lane.b32.xlu0 %v471, 32
      %v474 = vpop.permute.xlu0 %473
      %v475 = vrot.slane %v474, 6
      %v476 = vsel %vm320, %v475, %v474
      %v478 = vadd.f32 %v468, %v476
      %s479 = sld [smem:[#allocation3 + $0x32]]
      %v480 = vld [vmem:[%s325] sm:$0x3f]
      %v481 = vstv %s479
      %v482 = vmul.f32 %v481, %v480
      %v483 = vadd.f32 %v478, %v482
      %s484 = sld [smem:[#allocation3 + $0x39]]
      %v485 = vstv %s484
      %v486 = vmul.f32 %v485, %v480
      %488 = vrot.lane.b32.xlu0 %v486, 112
      %v489 = vpop.permute.xlu0 %488
      %v490 = vrot.slane %v489, 2
      %v491 = vsel %vm264, %v489, %v490
      %v493 = vadd.f32 %v483, %v491
      %s494 = sld [smem:[#allocation3 + $0x40]]
      %v495 = vstv %s494
      %v496 = vmul.f32 %v495, %v480
      %498 = vrot.lane.b32.xlu0 %v496, 96
      %v499 = vpop.permute.xlu0 %498
      %v500 = vrot.slane %v499, 2
      %v501 = vsel %vm275, %v499, %v500
      %v503 = vadd.f32 %v493, %v501
      %s504 = sld [smem:[#allocation3 + $0x47]]
      %v505 = vstv %s504
      %v506 = vmul.f32 %v505, %v480
      %508 = vrot.lane.b32.xlu0 %v506, 80
      %v509 = vpop.permute.xlu0 %508
      %v510 = vrot.slane %v509, 2
      %v511 = vsel %vm286, %v509, %v510
      %v513 = vadd.f32 %v503, %v511
      %s514 = sld [smem:[#allocation3 + $0x4e]]
      %v515 = vld [vmem:[%s325 + $0x2] sm:$0x3f]
      %v516 = vstv %s514
      %v517 = vmul.f32 %v516, %v515
      %519 = vrot.lane.b32.xlu0 %v517, 64
      %v520 = vpop.permute.xlu0 %519
      %v521 = vrot.slane %v520, 6
      %v522 = vsel %vm298, %v521, %v520
      %v524 = vadd.f32 %v513, %v522
      %s525 = sld [smem:[#allocation3 + $0x55]]
      %v526 = vstv %s525
      %v527 = vmul.f32 %v526, %v515
      %529 = vrot.lane.b32.xlu0 %v527, 48
      %v530 = vpop.permute.xlu0 %529
      %v531 = vrot.slane %v530, 6
      %v532 = vsel %vm309, %v531, %v530
      %v534 = vadd.f32 %v524, %v532
      %s535 = sld [smem:[#allocation3 + $0x5c]]
      %v536 = vstv %s535
      %v537 = vmul.f32 %v536, %v515
      %539 = vrot.lane.b32.xlu0 %v537, 32
      %v540 = vpop.permute.xlu0 %539
      %v541 = vrot.slane %v540, 6
      %v542 = vsel %vm320, %v541, %v540
      %v544 = vadd.f32 %v534, %v542
      %vm545 = vcmp.ge.s32.totalorder %v250, 2
      %vm546 = vcmp.ge.s32.totalorder %v251, 2
      %548 = vst [vmem:[#allocation1] ss:$4 sm:$0xff] %v544
      %v549 = vld.sshfl [vmem:[#allocation1] sm:$0xff pattern:$0x73625140]
      %v550 = vld.sshfl [vmem:[#allocation1 + $0x8] sm:$0xff pattern:$0x73625140]
      %v551 = vld.sshfl [vmem:[#allocation1 + $0x10] sm:$0xff pattern:$0x73625140]
      %552 = vrot.lane.b32.xlu0 %v549, 50
      %v553 = vpop.permute.xlu0 %552
      %554 = vrot.lane.b32.xlu0 %v550, 50
      %v555 = vpop.permute.xlu0 %554
      %556 = vrot.lane.b32.xlu0 %v551, 50
      %v557 = vpop.permute.xlu0 %556
      %vm558 = vcmask 408576
      %v559 = vsel %vm558, %v553, %v555
      %v560 = vsel %vm558, %v555, %v557
      %v563 = vsel %vm545, %v559, 0.0
      %v564 = vsel %vm546, %v560, 0.0
      %v565 = vadd.f32 %v411, %v563
      %v566 = vadd.f32 %v412, %v564
      %s567 = sld [smem:[#allocation3 + $0x2]]
      %v568 = vld [vmem:[#allocation2] sm:$0x3f]
      %v569 = vstv %s567
      %v570 = vmul.f32 %v569, %v568
      %v571 = vadd.f32 %v570, 0.0
      %s572 = sld [smem:[#allocation3 + $0x9]]
      %v573 = vstv %s572
      %v574 = vmul.f32 %v573, %v568
      %576 = vrot.lane.b32.xlu0 %v574, 112
      %v577 = vpop.permute.xlu0 %576
      %v578 = vrot.slane %v577, 2
      %v579 = vsel %vm264, %v577, %v578
      %v581 = vadd.f32 %v571, %v579
      %s582 = sld [smem:[#allocation3 + $0x10]]
      %v583 = vstv %s582
      %v584 = vmul.f32 %v583, %v568
      %586 = vrot.lane.b32.xlu0 %v584, 96
      %v587 = vpop.permute.xlu0 %586
      %v588 = vrot.slane %v587, 2
      %v589 = vsel %vm275, %v587, %v588
      %v591 = vadd.f32 %v581, %v589
      %s592 = sld [smem:[#allocation3 + $0x17]]
      %v593 = vstv %s592
      %v594 = vmul.f32 %v593, %v568
      %596 = vrot.lane.b32.xlu0 %v594, 80
      %v597 = vpop.permute.xlu0 %596
      %v598 = vrot.slane %v597, 2
      %v599 = vsel %vm286, %v597, %v598
      %v601 = vadd.f32 %v591, %v599
      %s602 = sld [smem:[#allocation3 + $0x1e]]
      %v603 = vld [vmem:[#allocation2 + $0x2] sm:$0x3f]
      %v604 = vstv %s602
      %v605 = vmul.f32 %v604, %v603
      %607 = vrot.lane.b32.xlu0 %v605, 64
      %v608 = vpop.permute.xlu0 %607
      %v609 = vrot.slane %v608, 6
      %v610 = vsel %vm298, %v609, %v608
      %v612 = vadd.f32 %v601, %v610
      %s613 = sld [smem:[#allocation3 + $0x25]]
      %v614 = vstv %s613
      %v615 = vmul.f32 %v614, %v603
      %617 = vrot.lane.b32.xlu0 %v615, 48
      %v618 = vpop.permute.xlu0 %617
      %v619 = vrot.slane %v618, 6
      %v620 = vsel %vm309, %v619, %v618
      %v622 = vadd.f32 %v612, %v620
      %s623 = sld [smem:[#allocation3 + $0x2c]]
      %v624 = vstv %s623
      %v625 = vmul.f32 %v624, %v603
      %627 = vrot.lane.b32.xlu0 %v625, 32
      %v628 = vpop.permute.xlu0 %627
      %v629 = vrot.slane %v628, 6
      %v630 = vsel %vm320, %v629, %v628
      %v632 = vadd.f32 %v622, %v630
      %s633 = sld [smem:[#allocation3 + $0x33]]
      %v634 = vld [vmem:[%s325] sm:$0x3f]
      %v635 = vstv %s633
      %v636 = vmul.f32 %v635, %v634
      %v637 = vadd.f32 %v632, %v636
      %s638 = sld [smem:[#allocation3 + $0x3a]]
      %v639 = vstv %s638
      %v640 = vmul.f32 %v639, %v634
      %642 = vrot.lane.b32.xlu0 %v640, 112
      %v643 = vpop.permute.xlu0 %642
      %v644 = vrot.slane %v643, 2
      %v645 = vsel %vm264, %v643, %v644
      %v647 = vadd.f32 %v637, %v645
      %s648 = sld [smem:[#allocation3 + $0x41]]
      %v649 = vstv %s648
      %v650 = vmul.f32 %v649, %v634
      %652 = vrot.lane.b32.xlu0 %v650, 96
      %v653 = vpop.permute.xlu0 %652
      %v654 = vrot.slane %v653, 2
      %v655 = vsel %vm275, %v653, %v654
      %v657 = vadd.f32 %v647, %v655
      %s658 = sld [smem:[#allocation3 + $0x48]]
      %v659 = vstv %s658
      %v660 = vmul.f32 %v659, %v634
      %662 = vrot.lane.b32.xlu0 %v660, 80
      %v663 = vpop.permute.xlu0 %662
      %v664 = vrot.slane %v663, 2
      %v665 = vsel %vm286, %v663, %v664
      %v667 = vadd.f32 %v657, %v665
      %s668 = sld [smem:[#allocation3 + $0x4f]]
      %v669 = vld [vmem:[%s325 + $0x2] sm:$0x3f]
      %v670 = vstv %s668
      %v671 = vmul.f32 %v670, %v669
      %673 = vrot.lane.b32.xlu0 %v671, 64
      %v674 = vpop.permute.xlu0 %673
      %v675 = vrot.slane %v674, 6
      %v676 = vsel %vm298, %v675, %v674
      %v678 = vadd.f32 %v667, %v676
      %s679 = sld [smem:[#allocation3 + $0x56]]
      %v680 = vstv %s679
      %v681 = vmul.f32 %v680, %v669
      %683 = vrot.lane.b32.xlu0 %v681, 48
      %v684 = vpop.permute.xlu0 %683
      %v685 = vrot.slane %v684, 6
      %v686 = vsel %vm309, %v685, %v684
      %v688 = vadd.f32 %v678, %v686
      %s689 = sld [smem:[#allocation3 + $0x5d]]
      %v690 = vstv %s689
      %v691 = vmul.f32 %v690, %v669
      %693 = vrot.lane.b32.xlu0 %v691, 32
      %v694 = vpop.permute.xlu0 %693
      %v695 = vrot.slane %v694, 6
      %v696 = vsel %vm320, %v695, %v694
      %v698 = vadd.f32 %v688, %v696
      %vm699 = vcmp.ge.s32.totalorder %v250, 1
      %vm700 = vcmp.ge.s32.totalorder %v251, 1
      %702 = vst [vmem:[#allocation1] ss:$4 sm:$0xff] %v698
      %v703 = vld.sshfl [vmem:[#allocation1] sm:$0xff pattern:$0x73625140]
      %v704 = vld.sshfl [vmem:[#allocation1 + $0x8] sm:$0xff pattern:$0x73625140]
      %v705 = vld.sshfl [vmem:[#allocation1 + $0x10] sm:$0xff pattern:$0x73625140]
      %706 = vrot.lane.b32.xlu0 %v703, 49
      %v707 = vpop.permute.xlu0 %706
      %708 = vrot.lane.b32.xlu0 %v704, 49
      %v709 = vpop.permute.xlu0 %708
      %710 = vrot.lane.b32.xlu0 %v705, 49
      %v711 = vpop.permute.xlu0 %710
      %vm712 = vcmask 400384
      %v713 = vsel %vm712, %v707, %v709
      %v714 = vsel %vm712, %v709, %v711
      %v717 = vsel %vm699, %v713, 0.0
      %v718 = vsel %vm700, %v714, 0.0
      %v719 = vadd.f32 %v565, %v717
      %v720 = vadd.f32 %v566, %v718
      %s721 = sld [smem:[#allocation3 + $0x3]]
      %v722 = vld [vmem:[#allocation2] sm:$0x3f]
      %v723 = vstv %s721
      %v724 = vmul.f32 %v723, %v722
      %v725 = vadd.f32 %v724, 0.0
      %s726 = sld [smem:[#allocation3 + $0xa]]
      %v727 = vstv %s726
      %v728 = vmul.f32 %v727, %v722
      %730 = vrot.lane.b32.xlu0 %v728, 112
      %v731 = vpop.permute.xlu0 %730
      %v732 = vrot.slane %v731, 2
      %v733 = vsel %vm264, %v731, %v732
      %v735 = vadd.f32 %v725, %v733
      %s736 = sld [smem:[#allocation3 + $0x11]]
      %v737 = vstv %s736
      %v738 = vmul.f32 %v737, %v722
      %740 = vrot.lane.b32.xlu0 %v738, 96
      %v741 = vpop.permute.xlu0 %740
      %v742 = vrot.slane %v741, 2
      %v743 = vsel %vm275, %v741, %v742
      %v745 = vadd.f32 %v735, %v743
      %s746 = sld [smem:[#allocation3 + $0x18]]
      %v747 = vld [vmem:[#allocation2 + $0x2] sm:$0xf]
      %v748 = vstv %s746
      %v749 = vmul.f32 %v748, %v747
      %751 = vrot.lane.b32.xlu0 %v749, 80
      %v752 = vpop.permute.xlu0 %751
      %v753 = vrot.slane %v752, 6
      %v754 = vsel %vm286, %v753, %v752
      %v756 = vadd.f32 %v745, %v754
      %s757 = sld [smem:[#allocation3 + $0x1f]]
      %v758 = vld [vmem:[#allocation2 + $0x2] sm:$0x3f]
      %v759 = vstv %s757
      %v760 = vmul.f32 %v759, %v758
      %762 = vrot.lane.b32.xlu0 %v760, 64
      %v763 = vpop.permute.xlu0 %762
      %v764 = vrot.slane %v763, 6
      %v765 = vsel %vm298, %v764, %v763
      %v767 = vadd.f32 %v756, %v765
      %s768 = sld [smem:[#allocation3 + $0x26]]
      %v769 = vstv %s768
      %v770 = vmul.f32 %v769, %v758
      %772 = vrot.lane.b32.xlu0 %v770, 48
      %v773 = vpop.permute.xlu0 %772
      %v774 = vrot.slane %v773, 6
      %v775 = vsel %vm309, %v774, %v773
      %v777 = vadd.f32 %v767, %v775
      %s778 = sld [smem:[#allocation3 + $0x2d]]
      %v779 = vstv %s778
      %v780 = vmul.f32 %v779, %v758
      %782 = vrot.lane.b32.xlu0 %v780, 32
      %v783 = vpop.permute.xlu0 %782
      %v784 = vrot.slane %v783, 6
      %v785 = vsel %vm320, %v784, %v783
      %v787 = vadd.f32 %v777, %v785
      %s788 = sld [smem:[#allocation3 + $0x34]]
      %v789 = vld [vmem:[%s325] sm:$0x3f]
      %v790 = vstv %s788
      %v791 = vmul.f32 %v790, %v789
      %v792 = vadd.f32 %v787, %v791
      %s793 = sld [smem:[#allocation3 + $0x3b]]
      %v794 = vstv %s793
      %v795 = vmul.f32 %v794, %v789
      %797 = vrot.lane.b32.xlu0 %v795, 112
      %v798 = vpop.permute.xlu0 %797
      %v799 = vrot.slane %v798, 2
      %v800 = vsel %vm264, %v798, %v799
      %v802 = vadd.f32 %v792, %v800
      %s803 = sld [smem:[#allocation3 + $0x42]]
      %v804 = vstv %s803
      %v805 = vmul.f32 %v804, %v789
      %807 = vrot.lane.b32.xlu0 %v805, 96
      %v808 = vpop.permute.xlu0 %807
      %v809 = vrot.slane %v808, 2
      %v810 = vsel %vm275, %v808, %v809
      %v812 = vadd.f32 %v802, %v810
      %s813 = sld [smem:[#allocation3 + $0x49]]
      %v814 = vld [vmem:[%s325 + $0x2] sm:$0xf]
      %v815 = vstv %s813
      %v816 = vmul.f32 %v815, %v814
      %818 = vrot.lane.b32.xlu0 %v816, 80
      %v819 = vpop.permute.xlu0 %818
      %v820 = vrot.slane %v819, 6
      %v821 = vsel %vm286, %v820, %v819
      %v823 = vadd.f32 %v812, %v821
      %s824 = sld [smem:[#allocation3 + $0x50]]
      %v825 = vld [vmem:[%s325 + $0x2] sm:$0x3f]
      %v826 = vstv %s824
      %v827 = vmul.f32 %v826, %v825
      %829 = vrot.lane.b32.xlu0 %v827, 64
      %v830 = vpop.permute.xlu0 %829
      %v831 = vrot.slane %v830, 6
      %v832 = vsel %vm298, %v831, %v830
      %v834 = vadd.f32 %v823, %v832
      %s835 = sld [smem:[#allocation3 + $0x57]]
      %v836 = vstv %s835
      %v837 = vmul.f32 %v836, %v825
      %839 = vrot.lane.b32.xlu0 %v837, 48
      %v840 = vpop.permute.xlu0 %839
      %v841 = vrot.slane %v840, 6
      %v842 = vsel %vm309, %v841, %v840
      %v844 = vadd.f32 %v834, %v842
      %s845 = sld [smem:[#allocation3 + $0x5e]]
      %v846 = vstv %s845
      %v847 = vmul.f32 %v846, %v825
      %849 = vrot.lane.b32.xlu0 %v847, 32
      %v850 = vpop.permute.xlu0 %849
      %v851 = vrot.slane %v850, 6
      %v852 = vsel %vm320, %v851, %v850
      %v854 = vadd.f32 %v844, %v852
      %856 = vst [vmem:[#allocation1] ss:$4 sm:$0xff] %v854
      %v857 = vld.sshfl [vmem:[#allocation1] sm:$0xff pattern:$0x73625140]
      %v858 = vld.sshfl [vmem:[#allocation1 + $0x8] sm:$0xff pattern:$0x73625140]
      %v859 = vld.sshfl [vmem:[#allocation1 + $0x10] sm:$0xff pattern:$0x73625140]
      %860 = vrot.lane.b32.xlu0 %v857, 48
      %v861 = vpop.permute.xlu0 %860
      %862 = vrot.lane.b32.xlu0 %v858, 48
      %v863 = vpop.permute.xlu0 %862
      %864 = vrot.lane.b32.xlu0 %v859, 48
      %v865 = vpop.permute.xlu0 %864
      %v866 = vsel %vm309, %v861, %v863
      %v867 = vsel %vm309, %v863, %v865
      %v870 = vadd.f32 %v719, %v866
      %v871 = vadd.f32 %v720, %v867
      %s872 = sld [smem:[#allocation3 + $0x4]]
      %v873 = vld [vmem:[#allocation2] sm:$0x3f]
      %v874 = vstv %s872
      %v875 = vmul.f32 %v874, %v873
      %v876 = vadd.f32 %v875, 0.0
      %s877 = sld [smem:[#allocation3 + $0xb]]
      %v878 = vstv %s877
      %v879 = vmul.f32 %v878, %v873
      %881 = vrot.lane.b32.xlu0 %v879, 112
      %v882 = vpop.permute.xlu0 %881
      %v883 = vrot.slane %v882, 2
      %v884 = vsel %vm264, %v882, %v883
      %v886 = vadd.f32 %v876, %v884
      %s887 = sld [smem:[#allocation3 + $0x12]]
      %v888 = vstv %s887
      %v889 = vmul.f32 %v888, %v873
      %891 = vrot.lane.b32.xlu0 %v889, 96
      %v892 = vpop.permute.xlu0 %891
      %v893 = vrot.slane %v892, 2
      %v894 = vsel %vm275, %v892, %v893
      %v896 = vadd.f32 %v886, %v894
      %s897 = sld [smem:[#allocation3 + $0x19]]
      %v898 = vld [vmem:[#allocation2 + $0x2] sm:$0x3f]
      %v899 = vstv %s897
      %v900 = vmul.f32 %v899, %v898
      %902 = vrot.lane.b32.xlu0 %v900, 80
      %v903 = vpop.permute.xlu0 %902
      %v904 = vrot.slane %v903, 6
      %v905 = vsel %vm286, %v904, %v903
      %v907 = vadd.f32 %v896, %v905
      %s908 = sld [smem:[#allocation3 + $0x20]]
      %v909 = vstv %s908
      %v910 = vmul.f32 %v909, %v898
      %912 = vrot.lane.b32.xlu0 %v910, 64
      %v913 = vpop.permute.xlu0 %912
      %v914 = vrot.slane %v913, 6
      %v915 = vsel %vm298, %v914, %v913
      %v917 = vadd.f32 %v907, %v915
      %s918 = sld [smem:[#allocation3 + $0x27]]
      %v919 = vstv %s918
      %v920 = vmul.f32 %v919, %v898
      %922 = vrot.lane.b32.xlu0 %v920, 48
      %v923 = vpop.permute.xlu0 %922
      %v924 = vrot.slane %v923, 6
      %v925 = vsel %vm309, %v924, %v923
      %v927 = vadd.f32 %v917, %v925
      %s928 = sld [smem:[#allocation3 + $0x2e]]
      %v929 = vstv %s928
      %v930 = vmul.f32 %v929, %v898
      %932 = vrot.lane.b32.xlu0 %v930, 32
      %v933 = vpop.permute.xlu0 %932
      %v934 = vrot.slane %v933, 6
      %v935 = vsel %vm320, %v934, %v933
      %v937 = vadd.f32 %v927, %v935
      %s938 = sld [smem:[#allocation3 + $0x35]]
      %v939 = vld [vmem:[%s325] sm:$0x3f]
      %v940 = vstv %s938
      %v941 = vmul.f32 %v940, %v939
      %v942 = vadd.f32 %v937, %v941
      %s943 = sld [smem:[#allocation3 + $0x3c]]
      %v944 = vstv %s943
      %v945 = vmul.f32 %v944, %v939
      %947 = vrot.lane.b32.xlu0 %v945, 112
      %v948 = vpop.permute.xlu0 %947
      %v949 = vrot.slane %v948, 2
      %v950 = vsel %vm264, %v948, %v949
      %v952 = vadd.f32 %v942, %v950
      %s953 = sld [smem:[#allocation3 + $0x43]]
      %v954 = vstv %s953
      %v955 = vmul.f32 %v954, %v939
      %957 = vrot.lane.b32.xlu0 %v955, 96
      %v958 = vpop.permute.xlu0 %957
      %v959 = vrot.slane %v958, 2
      %v960 = vsel %vm275, %v958, %v959
      %v962 = vadd.f32 %v952, %v960
      %s963 = sld [smem:[#allocation3 + $0x4a]]
      %v964 = vld [vmem:[%s325 + $0x2] sm:$0x3f]
      %v965 = vstv %s963
      %v966 = vmul.f32 %v965, %v964
      %968 = vrot.lane.b32.xlu0 %v966, 80
      %v969 = vpop.permute.xlu0 %968
      %v970 = vrot.slane %v969, 6
      %v971 = vsel %vm286, %v970, %v969
      %v973 = vadd.f32 %v962, %v971
      %s974 = sld [smem:[#allocation3 + $0x51]]
      %v975 = vstv %s974
      %v976 = vmul.f32 %v975, %v964
      %978 = vrot.lane.b32.xlu0 %v976, 64
      %v979 = vpop.permute.xlu0 %978
      %v980 = vrot.slane %v979, 6
      %v981 = vsel %vm298, %v980, %v979
      %v983 = vadd.f32 %v973, %v981
      %s984 = sld [smem:[#allocation3 + $0x58]]
      %v985 = vstv %s984
      %v986 = vmul.f32 %v985, %v964
      %988 = vrot.lane.b32.xlu0 %v986, 48
      %v989 = vpop.permute.xlu0 %988
      %v990 = vrot.slane %v989, 6
      %v991 = vsel %vm309, %v990, %v989
      %v993 = vadd.f32 %v983, %v991
      %s994 = sld [smem:[#allocation3 + $0x5f]]
      %v995 = vstv %s994
      %v996 = vmul.f32 %v995, %v964
      %998 = vrot.lane.b32.xlu0 %v996, 32
      %v999 = vpop.permute.xlu0 %998
      %v1000 = vrot.slane %v999, 6
      %v1001 = vsel %vm320, %v1000, %v999
      %v1003 = vadd.f32 %v993, %v1001
      %vm1004 = vcmp.lt.s32.totalorder %v250, 15
      %vm1005 = vcmp.lt.s32.totalorder %v251, 15
      %1007 = vst [vmem:[#allocation1] ss:$4 sm:$0xff] %v1003
      %v1008 = vld.sshfl [vmem:[#allocation1] sm:$0xff pattern:$0x73625140]
      %v1009 = vld.sshfl [vmem:[#allocation1 + $0x8] sm:$0xff pattern:$0x73625140]
      %v1010 = vld.sshfl [vmem:[#allocation1 + $0x10] sm:$0xff pattern:$0x73625140]
      %1011 = vrot.lane.b32.xlu0 %v1008, 47
      %v1012 = vpop.permute.xlu0 %1011
      %1013 = vrot.lane.b32.xlu0 %v1009, 47
      %v1014 = vpop.permute.xlu0 %1013
      %1015 = vrot.lane.b32.xlu0 %v1010, 47
      %v1016 = vpop.permute.xlu0 %1015
      %vm1017 = vcmask 384000
      %v1018 = vsel %vm1017, %v1012, %v1014
      %v1019 = vsel %vm1017, %v1014, %v1016
      %v1022 = vsel %vm1004, %v1018, 0.0
      %v1023 = vsel %vm1005, %v1019, 0.0
      %v1024 = vadd.f32 %v870, %v1022
      %v1025 = vadd.f32 %v871, %v1023
      %s1026 = sld [smem:[#allocation3 + $0x5]]
      %v1027 = vld [vmem:[#allocation2] sm:$0x3f]
      %v1028 = vstv %s1026
      %v1029 = vmul.f32 %v1028, %v1027
      %v1030 = vadd.f32 %v1029, 0.0
      %s1031 = sld [smem:[#allocation3 + $0xc]]
      %v1032 = vstv %s1031
      %v1033 = vmul.f32 %v1032, %v1027
      %1035 = vrot.lane.b32.xlu0 %v1033, 112
      %v1036 = vpop.permute.xlu0 %1035
      %v1037 = vrot.slane %v1036, 2
      %v1038 = vsel %vm264, %v1036, %v1037
      %v1040 = vadd.f32 %v1030, %v1038
      %s1041 = sld [smem:[#allocation3 + $0x13]]
      %v1042 = vstv %s1041
      %v1043 = vmul.f32 %v1042, %v1027
      %1045 = vrot.lane.b32.xlu0 %v1043, 96
      %v1046 = vpop.permute.xlu0 %1045
      %v1047 = vrot.slane %v1046, 2
      %v1048 = vsel %vm275, %v1046, %v1047
      %v1050 = vadd.f32 %v1040, %v1048
      %s1051 = sld [smem:[#allocation3 + $0x1a]]
      %v1052 = vld [vmem:[#allocation2 + $0x2] sm:$0x3f]
      %v1053 = vstv %s1051
      %v1054 = vmul.f32 %v1053, %v1052
      %1056 = vrot.lane.b32.xlu0 %v1054, 80
      %v1057 = vpop.permute.xlu0 %1056
      %v1058 = vrot.slane %v1057, 6
      %v1059 = vsel %vm286, %v1058, %v1057
      %v1061 = vadd.f32 %v1050, %v1059
      %s1062 = sld [smem:[#allocation3 + $0x21]]
      %v1063 = vstv %s1062
      %v1064 = vmul.f32 %v1063, %v1052
      %1066 = vrot.lane.b32.xlu0 %v1064, 64
      %v1067 = vpop.permute.xlu0 %1066
      %v1068 = vrot.slane %v1067, 6
      %v1069 = vsel %vm298, %v1068, %v1067
      %v1071 = vadd.f32 %v1061, %v1069
      %s1072 = sld [smem:[#allocation3 + $0x28]]
      %v1073 = vstv %s1072
      %v1074 = vmul.f32 %v1073, %v1052
      %1076 = vrot.lane.b32.xlu0 %v1074, 48
      %v1077 = vpop.permute.xlu0 %1076
      %v1078 = vrot.slane %v1077, 6
      %v1079 = vsel %vm309, %v1078, %v1077
      %v1081 = vadd.f32 %v1071, %v1079
      %s1082 = sld [smem:[#allocation3 + $0x2f]]
      %v1083 = vstv %s1082
      %v1084 = vmul.f32 %v1083, %v1052
      %1086 = vrot.lane.b32.xlu0 %v1084, 32
      %v1087 = vpop.permute.xlu0 %1086
      %v1088 = vrot.slane %v1087, 6
      %v1089 = vsel %vm320, %v1088, %v1087
      %v1091 = vadd.f32 %v1081, %v1089
      %s1092 = sld [smem:[#allocation3 + $0x36]]
      %v1093 = vld [vmem:[%s325] sm:$0x3f]
      %v1094 = vstv %s1092
      %v1095 = vmul.f32 %v1094, %v1093
      %v1096 = vadd.f32 %v1091, %v1095
      %s1097 = sld [smem:[#allocation3 + $0x3d]]
      %v1098 = vstv %s1097
      %v1099 = vmul.f32 %v1098, %v1093
      %1101 = vrot.lane.b32.xlu0 %v1099, 112
      %v1102 = vpop.permute.xlu0 %1101
      %v1103 = vrot.slane %v1102, 2
      %v1104 = vsel %vm264, %v1102, %v1103
      %v1106 = vadd.f32 %v1096, %v1104
      %s1107 = sld [smem:[#allocation3 + $0x44]]
      %v1108 = vstv %s1107
      %v1109 = vmul.f32 %v1108, %v1093
      %1111 = vrot.lane.b32.xlu0 %v1109, 96
      %v1112 = vpop.permute.xlu0 %1111
      %v1113 = vrot.slane %v1112, 2
      %v1114 = vsel %vm275, %v1112, %v1113
      %v1116 = vadd.f32 %v1106, %v1114
      %s1117 = sld [smem:[#allocation3 + $0x4b]]
      %v1118 = vld [vmem:[%s325 + $0x2] sm:$0x3f]
      %v1119 = vstv %s1117
      %v1120 = vmul.f32 %v1119, %v1118
      %1122 = vrot.lane.b32.xlu0 %v1120, 80
      %v1123 = vpop.permute.xlu0 %1122
      %v1124 = vrot.slane %v1123, 6
      %v1125 = vsel %vm286, %v1124, %v1123
      %v1127 = vadd.f32 %v1116, %v1125
      %s1128 = sld [smem:[#allocation3 + $0x52]]
      %v1129 = vstv %s1128
      %v1130 = vmul.f32 %v1129, %v1118
      %1132 = vrot.lane.b32.xlu0 %v1130, 64
      %v1133 = vpop.permute.xlu0 %1132
      %v1134 = vrot.slane %v1133, 6
      %v1135 = vsel %vm298, %v1134, %v1133
      %v1137 = vadd.f32 %v1127, %v1135
      %s1138 = sld [smem:[#allocation3 + $0x59]]
      %v1139 = vstv %s1138
      %v1140 = vmul.f32 %v1139, %v1118
      %1142 = vrot.lane.b32.xlu0 %v1140, 48
      %v1143 = vpop.permute.xlu0 %1142
      %v1144 = vrot.slane %v1143, 6
      %v1145 = vsel %vm309, %v1144, %v1143
      %v1147 = vadd.f32 %v1137, %v1145
      %s1148 = sld [smem:[#allocation3 + $0x60]]
      %v1149 = vstv %s1148
      %v1150 = vmul.f32 %v1149, %v1118
      %1152 = vrot.lane.b32.xlu0 %v1150, 32
      %v1153 = vpop.permute.xlu0 %1152
      %v1154 = vrot.slane %v1153, 6
      %v1155 = vsel %vm320, %v1154, %v1153
      %v1157 = vadd.f32 %v1147, %v1155
      %vm1158 = vcmp.lt.s32.totalorder %v250, 14
      %vm1159 = vcmp.lt.s32.totalorder %v251, 14
      %1161 = vst [vmem:[#allocation1] ss:$4 sm:$0xff] %v1157
      %v1162 = vld.sshfl [vmem:[#allocation1] sm:$0xff pattern:$0x73625140]
      %v1163 = vld.sshfl [vmem:[#allocation1 + $0x8] sm:$0xff pattern:$0x73625140]
      %v1164 = vld.sshfl [vmem:[#allocation1 + $0x10] sm:$0xff pattern:$0x73625140]
      %1165 = vrot.lane.b32.xlu0 %v1162, 46
      %v1166 = vpop.permute.xlu0 %1165
      %1167 = vrot.lane.b32.xlu0 %v1163, 46
      %v1168 = vpop.permute.xlu0 %1167
      %1169 = vrot.lane.b32.xlu0 %v1164, 46
      %v1170 = vpop.permute.xlu0 %1169
      %vm1171 = vcmask 375808
      %v1172 = vsel %vm1171, %v1166, %v1168
      %v1173 = vsel %vm1171, %v1168, %v1170
      %v1176 = vsel %vm1158, %v1172, 0.0
      %v1177 = vsel %vm1159, %v1173, 0.0
      %v1178 = vadd.f32 %v1024, %v1176
      %v1179 = vadd.f32 %v1025, %v1177
      %s1180 = sld [smem:[#allocation3 + $0x6]]
      %v1181 = vld [vmem:[#allocation2] sm:$0x3f]
      %v1182 = vstv %s1180
      %v1183 = vmul.f32 %v1182, %v1181
      %v1184 = vadd.f32 %v1183, 0.0
      %s1185 = sld [smem:[#allocation3 + $0xd]]
      %v1186 = vstv %s1185
      %v1187 = vmul.f32 %v1186, %v1181
      %1189 = vrot.lane.b32.xlu0 %v1187, 112
      %v1190 = vpop.permute.xlu0 %1189
      %v1191 = vrot.slane %v1190, 2
      %v1192 = vsel %vm264, %v1190, %v1191
      %v1194 = vadd.f32 %v1184, %v1192
      %s1195 = sld [smem:[#allocation3 + $0x14]]
      %v1196 = vstv %s1195
      %v1197 = vmul.f32 %v1196, %v1181
      %1199 = vrot.lane.b32.xlu0 %v1197, 96
      %v1200 = vpop.permute.xlu0 %1199
      %v1201 = vrot.slane %v1200, 2
      %v1202 = vsel %vm275, %v1200, %v1201
      %v1204 = vadd.f32 %v1194, %v1202
      %s1205 = sld [smem:[#allocation3 + $0x1b]]
      %v1206 = vld [vmem:[#allocation2 + $0x2] sm:$0x3f]
      %v1207 = vstv %s1205
      %v1208 = vmul.f32 %v1207, %v1206
      %1210 = vrot.lane.b32.xlu0 %v1208, 80
      %v1211 = vpop.permute.xlu0 %1210
      %v1212 = vrot.slane %v1211, 6
      %v1213 = vsel %vm286, %v1212, %v1211
      %v1215 = vadd.f32 %v1204, %v1213
      %s1216 = sld [smem:[#allocation3 + $0x22]]
      %v1217 = vstv %s1216
      %v1218 = vmul.f32 %v1217, %v1206
      %1220 = vrot.lane.b32.xlu0 %v1218, 64
      %v1221 = vpop.permute.xlu0 %1220
      %v1222 = vrot.slane %v1221, 6
      %v1223 = vsel %vm298, %v1222, %v1221
      %v1225 = vadd.f32 %v1215, %v1223
      %s1226 = sld [smem:[#allocation3 + $0x29]]
      %v1227 = vstv %s1226
      %v1228 = vmul.f32 %v1227, %v1206
      %1230 = vrot.lane.b32.xlu0 %v1228, 48
      %v1231 = vpop.permute.xlu0 %1230
      %v1232 = vrot.slane %v1231, 6
      %v1233 = vsel %vm309, %v1232, %v1231
      %v1235 = vadd.f32 %v1225, %v1233
      %s1236 = sld [smem:[#allocation3 + $0x30]]
      %v1237 = vstv %s1236
      %v1238 = vmul.f32 %v1237, %v1206
      %1240 = vrot.lane.b32.xlu0 %v1238, 32
      %v1241 = vpop.permute.xlu0 %1240
      %v1242 = vrot.slane %v1241, 6
      %v1243 = vsel %vm320, %v1242, %v1241
      %v1245 = vadd.f32 %v1235, %v1243
      %s1246 = sld [smem:[#allocation3 + $0x37]]
      %v1247 = vld [vmem:[%s325] sm:$0x3f]
      %v1248 = vstv %s1246
      %v1249 = vmul.f32 %v1248, %v1247
      %v1250 = vadd.f32 %v1245, %v1249
      %s1251 = sld [smem:[#allocation3 + $0x3e]]
      %v1252 = vstv %s1251
      %v1253 = vmul.f32 %v1252, %v1247
      %1255 = vrot.lane.b32.xlu0 %v1253, 112
      %v1256 = vpop.permute.xlu0 %1255
      %v1257 = vrot.slane %v1256, 2
      %v1258 = vsel %vm264, %v1256, %v1257
      %v1260 = vadd.f32 %v1250, %v1258
      %s1261 = sld [smem:[#allocation3 + $0x45]]
      %v1262 = vstv %s1261
      %v1263 = vmul.f32 %v1262, %v1247
      %1265 = vrot.lane.b32.xlu0 %v1263, 96
      %v1266 = vpop.permute.xlu0 %1265
      %v1267 = vrot.slane %v1266, 2
      %v1268 = vsel %vm275, %v1266, %v1267
      %v1270 = vadd.f32 %v1260, %v1268
      %s1271 = sld [smem:[#allocation3 + $0x4c]]
      %v1272 = vld [vmem:[%s325 + $0x2] sm:$0x3f]
      %v1273 = vstv %s1271
      %v1274 = vmul.f32 %v1273, %v1272
      %1276 = vrot.lane.b32.xlu0 %v1274, 80
      %v1277 = vpop.permute.xlu0 %1276
      %v1278 = vrot.slane %v1277, 6
      %v1279 = vsel %vm286, %v1278, %v1277
      %v1281 = vadd.f32 %v1270, %v1279
      %s1282 = sld [smem:[#allocation3 + $0x53]]
      %v1283 = vstv %s1282
      %v1284 = vmul.f32 %v1283, %v1272
      %1286 = vrot.lane.b32.xlu0 %v1284, 64
      %v1287 = vpop.permute.xlu0 %1286
      %v1288 = vrot.slane %v1287, 6
      %v1289 = vsel %vm298, %v1288, %v1287
      %v1291 = vadd.f32 %v1281, %v1289
      %s1292 = sld [smem:[#allocation3 + $0x5a]]
      %v1293 = vstv %s1292
      %v1294 = vmul.f32 %v1293, %v1272
      %1296 = vrot.lane.b32.xlu0 %v1294, 48
      %v1297 = vpop.permute.xlu0 %1296
      %v1298 = vrot.slane %v1297, 6
      %v1299 = vsel %vm309, %v1298, %v1297
      %v1301 = vadd.f32 %v1291, %v1299
      %s1302 = sld [smem:[#allocation3 + $0x61]]
      %v1303 = vstv %s1302
      %v1304 = vmul.f32 %v1303, %v1272
      %1306 = vrot.lane.b32.xlu0 %v1304, 32
      %v1307 = vpop.permute.xlu0 %1306
      %v1308 = vrot.slane %v1307, 6
      %v1309 = vsel %vm320, %v1308, %v1307
      %v1311 = vadd.f32 %v1301, %v1309
      %vm1312 = vcmp.lt.s32.totalorder %v250, 13
      %vm1313 = vcmp.lt.s32.totalorder %v251, 13
      %1315 = vst [vmem:[#allocation1] ss:$4 sm:$0xff] %v1311
      %v1316 = vld.sshfl [vmem:[#allocation1] sm:$0xff pattern:$0x73625140]
      %v1317 = vld.sshfl [vmem:[#allocation1 + $0x8] sm:$0xff pattern:$0x73625140]
      %v1318 = vld.sshfl [vmem:[#allocation1 + $0x10] sm:$0xff pattern:$0x73625140]
      %1319 = vrot.lane.b32.xlu0 %v1316, 45
      %v1320 = vpop.permute.xlu0 %1319
      %1321 = vrot.lane.b32.xlu0 %v1317, 45
      %v1322 = vpop.permute.xlu0 %1321
      %1323 = vrot.lane.b32.xlu0 %v1318, 45
      %v1324 = vpop.permute.xlu0 %1323
      %vm1325 = vcmask 367616
      %v1326 = vsel %vm1325, %v1320, %v1322
      %v1327 = vsel %vm1325, %v1322, %v1324
      %v1330 = vsel %vm1312, %v1326, 0.0
      %v1331 = vsel %vm1313, %v1327, 0.0
      %v1332 = vadd.f32 %v1178, %v1330
      %v1333 = vadd.f32 %v1179, %v1331
      %v1334 = vxor.u32 %v1332, 2147483648
      %v1335 = vxor.u32 %v1333, 2147483648
      %v1336 = vmul.f32 %v1334, 1.442695
      %v1337 = vpow.pop %v1336
      %v1338 = vmul.f32 %v1335, 1.442695
      %v1339 = vpow.pop %v1338
      %v1340 = vadd.f32 %v1337, 1.0
      %v1341 = vadd.f32 %v1339, 1.0
      %v1342 = vrcp.pop %v1340
      %v1343 = vmul.f32 %v1340, %v1342
      %v1344 = vsub.f32 1.0, %v1343
      %v1345 = vmul.f32 %v1342, %v1344
      %v1346 = vadd.f32 %v1342, %v1345
      %vm1347 = vweird.f32 %v1340
      %vm1348 = vweird.f32 %v1342
      %vm1349 = vmor %vm1347, %vm1348
      %v1350 = vsel %vm1349, %v1342, %v1346
      %v1351 = vand.u32 2147483647, %v1340
      %vm1352 = vcmp.eq.f32.partialorder %v1351, 8.507059e+37
      %v1353 = vand.u32 %v1340, 2147483648
      %v1354 = vor.u32 1.1754944e-38, %v1353
      %v1355 = vsel %vm1352, %v1354, %v1350
      %v1356 = vmul.f32 1.0, %v1355
      %v1357 = vrcp.pop %v1341
      %v1358 = vmul.f32 %v1341, %v1357
      %v1359 = vsub.f32 1.0, %v1358
      %v1360 = vmul.f32 %v1357, %v1359
      %v1361 = vadd.f32 %v1357, %v1360
      %vm1362 = vweird.f32 %v1341
      %vm1363 = vweird.f32 %v1357
      %vm1364 = vmor %vm1362, %vm1363
      %v1365 = vsel %vm1364, %v1357, %v1361
      %v1366 = vand.u32 2147483647, %v1341
      %vm1367 = vcmp.eq.f32.partialorder %v1366, 8.507059e+37
      %v1368 = vand.u32 %v1341, 2147483648
      %v1369 = vor.u32 1.1754944e-38, %v1368
      %v1370 = vsel %vm1367, %v1369, %v1365
      %v1371 = vmul.f32 1.0, %v1370
      %v1374 = vrot.slane %v1371, 7
      %vm1375 = vcmask 1040384
      %v1376 = vsel %vm1375, %v1356, %v1374
      %vm1377 = vcmask 1041409
      %v1378 = vsel %vm1377, %v1356, %v1374
      %v1379 = vrot.slane %v1378, 1
      %v1382 = vlaneseq
      %vm1383 = vcmp.ge.s32.totalorder %v1382, 0
      %vm1384 = vcmp.lt.s32.totalorder %v1382, 256
      %vm1385 = vmand %vm1383, %vm1384
      %1386 = vst.msk [vmem:[#allocation8] sm:$0x3] %vm1385, %v1376
      %1387 = vst.msk [vmem:[#allocation8 + $0x2] sm:$0x3] %vm1385, %v1379
    $region29: #{tpu_custom_call.1} parent=1 // pred_fallthru
      _
    // Predicated region
    $region30: #{tpu_custom_call.1} parent=1 // pred_check
      _
    $region31: #{tpu_custom_call.1} parent=1 // pred_check_branch
      %1389 = sbr.rel (0) target = $region33
    $region32: #{tpu_custom_call.1} parent=1 // pred_region
      %1391 = vsyncadd [#allocation5], 0
      %s1392 = sshll.u32 [#allocation8], 4
      %s1393 = int_to_ptr.vmem [resolvable:$true] %s1392
      %s1394 = sshll.u32 %s2, 4
      %s1395 = int_to_ptr.hbm [resolvable:$true] %s1394
      %1400 = dma.vmem_to_hbm [thread:$0]  %s1393, 64, %s1395, [#allocation5], 32, 32, 2
    $region33: #{tpu_custom_call.1} parent=1 // pred_fallthru
      _
    // Predicated region
    $region34: #{tpu_custom_call.1} parent=1 // pred_check
      _
    $region35: #{tpu_custom_call.1} parent=1 // pred_check_branch
      %1402 = sbr.rel (0) target = $region37
    $region36: #{tpu_custom_call.1} parent=1 // pred_region
      %1404 = dma.done [#allocation5], 64
    $region37: #{tpu_custom_call.1} parent=1 // pred_fallthru
      _
    %1405 = vsyncpa [#allocation4], 1
    %1406 = vsyncpa [#allocation5], 1
    %1407 = vsyncpa [#allocation6], 1

</llo_original>
